<compile_context>
chip_gen: v7x
topology: tpu7x:2x2x1
jax: 0.10.0
libtpu: 0.0.40
codegen_flags: <defaults>
</compile_context>

<pallas_src>
import jax
import jax.numpy as jnp
from jax.experimental import pallas as pl
from jax.experimental.pallas import tpu as pltpu

LANE = 128     # TPU lane width
SUBLANE = 8    # TPU sublane width


def encoder_kernel(x_ref,
                   w0_ref, b0_ref,
                   w1_ref, b1_ref,
                   w2_ref, b2_ref,
                   w3_ref, b3_ref,
                   out_ref):
    """Fused MLP on one (TB, D_in) row tile; weights are VMEM-resident."""
    h = x_ref[...]

    h = jnp.dot(h, w0_ref[...], preferred_element_type=jnp.float32) + b0_ref[...]
    h = jnp.maximum(h, 0.0)

    h = jnp.dot(h, w1_ref[...], preferred_element_type=jnp.float32) + b1_ref[...]
    h = jnp.maximum(h, 0.0)

    h = jnp.dot(h, w2_ref[...], preferred_element_type=jnp.float32) + b2_ref[...]
    h = jnp.maximum(h, 0.0)

    out = jnp.dot(h, w3_ref[...], preferred_element_type=jnp.float32) + b3_ref[...]
    out_ref[...] = out.astype(out_ref.dtype)


def _round_up(v, m):
    return ((v + m - 1) // m) * m


def _choose_tb(batch, tb_max=1024):
    """Row tile: big for throughput, but >=2 grid steps whenever possible."""
    half = _round_up(pl.cdiv(batch, 2), SUBLANE)
    return min(tb_max, max(SUBLANE, half))


def encoder_forward(x, params, *, tb=None):
    """x: (B, input_size) f32. params: list of (W, b) with W:(in,out), b:(out,) or (1,out)."""
    B, d_in = x.shape

    # Normalize biases to 2-D (1, D_out) VMEM tiles.
    layers = [(w, b.reshape(1, -1)) for (w, b) in params]
    z_dim = layers[-1][0].shape[1]

    # --- lane-pad the last layer so the output store is lane-dense (128-wide) ---
    w_last, b_last = layers[-1]
    z_pad = _round_up(z_dim, LANE)
    if z_pad != z_dim:
        w_last = jnp.pad(w_last, ((0, 0), (0, z_pad - z_dim)))
        b_last = jnp.pad(b_last, ((0, 0), (0, z_pad - z_dim)))
    layers = layers[:-1] + [(w_last, b_last)]

    # --- batch tiling: ragged last block, no padded copy of x ---
    if tb is None:
        tb = _choose_tb(B)
    grid_b = pl.cdiv(B, tb)

    flat_params = []
    for w, b in layers:
        flat_params.append(w)
        flat_params.append(b)

    # Weights & biases constant across the grid (fetched once, VMEM-resident).
    def const_spec(arr):
        return pl.BlockSpec(arr.shape, lambda i: (0, 0))

    in_specs = [pl.BlockSpec((tb, d_in), lambda i: (i, 0))]
    in_specs += [const_spec(a) for a in flat_params]
    out_spec = pl.BlockSpec((tb, z_pad), lambda i: (i, 0))

    # Advisory cost estimate for XLA's scheduler.
    sizes = [w.shape for w, _ in layers]
    flops = 2 * B * sum(di * do for di, do in sizes)
    weight_bytes = sum(w.size * w.dtype.itemsize + b.size * b.dtype.itemsize
                       for w, b in layers)
    bytes_accessed = B * (d_in + z_pad) * 4 + weight_bytes
    cost = pl.CostEstimate(flops=flops, transcendentals=0,
                           bytes_accessed=bytes_accessed)

    out_padded = pl.pallas_call(
        encoder_kernel,
        out_shape=jax.ShapeDtypeStruct((B, z_pad), jnp.float32),
        grid=(grid_b,),
        in_specs=in_specs,
        out_specs=out_spec,
        compiler_params=pltpu.CompilerParams(
            dimension_semantics=("parallel",),
        ),
        cost_estimate=cost,
    )(x, *flat_params)

    return out_padded[:, :z_dim]


def init_params(key, input_size, hidden_sizes, z_dim):
    """Deterministic init mimicking nn.Linear default (uniform +-1/sqrt(fan_in))."""
    sizes = [input_size] + list(hidden_sizes) + [z_dim]
    params = []
    for i in range(len(sizes) - 1):
        fan_in, fan_out = sizes[i], sizes[i + 1]
        key, kw, kb = jax.random.split(key, 3)
        bound = 1.0 / (fan_in ** 0.5)
        w = jax.random.uniform(kw, (fan_in, fan_out), jnp.float32, -bound, bound)
        b = jax.random.uniform(kb, (fan_out,), jnp.float32, -bound, bound)
        params.append((w, b))
    return params


def encoder_reference(x, params):
    h = x
    for w, b in params[:-1]:
        h = jnp.maximum(h @ w + b.reshape(1, -1), 0.0)
    w, b = params[-1]
    return h @ w + b.reshape(1, -1)


if __name__ == "__main__":
    key = jax.random.PRNGKey(0)

    # Module defaults: input_size = 28*28 = 784, hidden = [128, 64, 8], z_dim = 2.
    input_size = 28 * 28
    hidden_sizes = [128, 64, 8]
    z_dim = 2
    batch = 300  # non-multiple of the sublane tile -> exercises the ragged last block

    k_x, k_p = jax.random.split(key)
    x = jax.random.normal(k_x, (batch, input_size), jnp.float32)
    params = init_params(k_p, input_size, hidden_sizes, z_dim)

    # Adaptive tile: batch=300 -> tb=152, grid=(2,), ragged last block of 148 rows.
    out = encoder_forward(x, params)
    out = jax.block_until_ready(out)

    ref = encoder_reference(x, params)
    assert out.shape == (batch, z_dim)
    assert jnp.allclose(out, ref, atol=1e-4, rtol=1e-4), "mismatch vs reference"

    print("KERNEL_OK")
</pallas_src>

<mosaic_0001>
module attributes {stable_mosaic.version = 11 : i64} {
  func.func @encoder_kernel(%arg0: i32, %arg1: memref<152x784xf32, #tpu.memory_space<vmem>>, %arg2: memref<784x128xf32, #tpu.memory_space<vmem>>, %arg3: memref<1x128xf32, #tpu.memory_space<vmem>>, %arg4: memref<128x64xf32, #tpu.memory_space<vmem>>, %arg5: memref<1x64xf32, #tpu.memory_space<vmem>>, %arg6: memref<64x8xf32, #tpu.memory_space<vmem>>, %arg7: memref<1x8xf32, #tpu.memory_space<vmem>>, %arg8: memref<8x128xf32, #tpu.memory_space<vmem>>, %arg9: memref<1x128xf32, #tpu.memory_space<vmem>>, %arg10: memref<152x128xf32, #tpu.memory_space<vmem>>) attributes {dimension_semantics = [#tpu.dimension_semantics<parallel>], iteration_bounds = array<i64: 2>, scalar_prefetch = 0 : i64, scratch_operands = 0 : i64, tpu.core_type = #tpu.core_type<tc>, window_params = [{transform_indices = @transform_0, window_bounds = array<i64: 152, 784>}, {pipeline_mode = #tpu.pipeline_mode<synchronous>, transform_indices = @transform_1, window_bounds = array<i64: 784, 128>}, {pipeline_mode = #tpu.pipeline_mode<synchronous>, transform_indices = @transform_2, window_bounds = array<i64: 1, 128>}, {pipeline_mode = #tpu.pipeline_mode<synchronous>, transform_indices = @transform_3, window_bounds = array<i64: 128, 64>}, {pipeline_mode = #tpu.pipeline_mode<synchronous>, transform_indices = @transform_4, window_bounds = array<i64: 1, 64>}, {pipeline_mode = #tpu.pipeline_mode<synchronous>, transform_indices = @transform_5, window_bounds = array<i64: 64, 8>}, {pipeline_mode = #tpu.pipeline_mode<synchronous>, transform_indices = @transform_6, window_bounds = array<i64: 1, 8>}, {pipeline_mode = #tpu.pipeline_mode<synchronous>, transform_indices = @transform_7, window_bounds = array<i64: 8, 128>}, {pipeline_mode = #tpu.pipeline_mode<synchronous>, transform_indices = @transform_8, window_bounds = array<i64: 1, 128>}, {transform_indices = @transform_9, window_bounds = array<i64: 152, 128>}]} {
    %c0 = arith.constant 0 : index
    %c0_0 = arith.constant 0 : index
    %0 = vector.load %arg1[%c0, %c0_0] : memref<152x784xf32, #tpu.memory_space<vmem>>, vector<152x784xf32>
    %c0_1 = arith.constant 0 : index
    %c0_2 = arith.constant 0 : index
    %1 = vector.load %arg2[%c0_1, %c0_2] : memref<784x128xf32, #tpu.memory_space<vmem>>, vector<784x128xf32>
    %cst = arith.constant dense<0.000000e+00> : vector<152x128xf32>
    %2 = tpu.matmul %0, %1, %cst {dimension_numbers = #tpu.dot_dimension_numbers<[1], [0], [0], [1], [0, 0, 1, 1], [], []>} : vector<152x784xf32>, vector<784x128xf32>, vector<152x128xf32> -> vector<152x128xf32>
    %c0_3 = arith.constant 0 : index
    %c0_4 = arith.constant 0 : index
    %3 = vector.load %arg3[%c0_3, %c0_4] : memref<1x128xf32, #tpu.memory_space<vmem>>, vector<1x128xf32>
    %4 = vector.broadcast %3 : vector<1x128xf32> to vector<152x128xf32>
    %5 = arith.addf %2, %4 : vector<152x128xf32>
    %cst_5 = arith.constant 0.000000e+00 : f32
    %6 = vector.broadcast %cst_5 : f32 to vector<152x128xf32>
    %7 = arith.maximumf %5, %6 : vector<152x128xf32>
    %c0_6 = arith.constant 0 : index
    %c0_7 = arith.constant 0 : index
    %8 = vector.load %arg4[%c0_6, %c0_7] : memref<128x64xf32, #tpu.memory_space<vmem>>, vector<128x64xf32>
    %cst_8 = arith.constant dense<0.000000e+00> : vector<152x64xf32>
    %9 = tpu.matmul %7, %8, %cst_8 {dimension_numbers = #tpu.dot_dimension_numbers<[1], [0], [0], [1], [0, 0, 1, 1], [], []>} : vector<152x128xf32>, vector<128x64xf32>, vector<152x64xf32> -> vector<152x64xf32>
    %c0_9 = arith.constant 0 : index
    %c0_10 = arith.constant 0 : index
    %10 = vector.load %arg5[%c0_9, %c0_10] : memref<1x64xf32, #tpu.memory_space<vmem>>, vector<1x64xf32>
    %11 = vector.broadcast %10 : vector<1x64xf32> to vector<152x64xf32>
    %12 = arith.addf %9, %11 : vector<152x64xf32>
    %cst_11 = arith.constant 0.000000e+00 : f32
    %13 = vector.broadcast %cst_11 : f32 to vector<152x64xf32>
    %14 = arith.maximumf %12, %13 : vector<152x64xf32>
    %c0_12 = arith.constant 0 : index
    %c0_13 = arith.constant 0 : index
    %15 = vector.load %arg6[%c0_12, %c0_13] : memref<64x8xf32, #tpu.memory_space<vmem>>, vector<64x8xf32>
    %cst_14 = arith.constant dense<0.000000e+00> : vector<152x8xf32>
    %16 = tpu.matmul %14, %15, %cst_14 {dimension_numbers = #tpu.dot_dimension_numbers<[1], [0], [0], [1], [0, 0, 1, 1], [], []>} : vector<152x64xf32>, vector<64x8xf32>, vector<152x8xf32> -> vector<152x8xf32>
    %c0_15 = arith.constant 0 : index
    %c0_16 = arith.constant 0 : index
    %17 = vector.load %arg7[%c0_15, %c0_16] : memref<1x8xf32, #tpu.memory_space<vmem>>, vector<1x8xf32>
    %18 = vector.broadcast %17 : vector<1x8xf32> to vector<152x8xf32>
    %19 = arith.addf %16, %18 : vector<152x8xf32>
    %cst_17 = arith.constant 0.000000e+00 : f32
    %20 = vector.broadcast %cst_17 : f32 to vector<152x8xf32>
    %21 = arith.maximumf %19, %20 : vector<152x8xf32>
    %c0_18 = arith.constant 0 : index
    %c0_19 = arith.constant 0 : index
    %22 = vector.load %arg8[%c0_18, %c0_19] : memref<8x128xf32, #tpu.memory_space<vmem>>, vector<8x128xf32>
    %cst_20 = arith.constant dense<0.000000e+00> : vector<152x128xf32>
    %23 = tpu.matmul %21, %22, %cst_20 {dimension_numbers = #tpu.dot_dimension_numbers<[1], [0], [0], [1], [0, 0, 1, 1], [], []>} : vector<152x8xf32>, vector<8x128xf32>, vector<152x128xf32> -> vector<152x128xf32>
    %c0_21 = arith.constant 0 : index
    %c0_22 = arith.constant 0 : index
    %24 = vector.load %arg9[%c0_21, %c0_22] : memref<1x128xf32, #tpu.memory_space<vmem>>, vector<1x128xf32>
    %25 = vector.broadcast %24 : vector<1x128xf32> to vector<152x128xf32>
    %26 = arith.addf %23, %25 : vector<152x128xf32>
    %c0_23 = arith.constant 0 : index
    %c0_24 = arith.constant 0 : index
    %27 = vector.load %arg10[%c0_23, %c0_24] : memref<152x128xf32, #tpu.memory_space<vmem>>, vector<152x128xf32>
    tpu.vector_store %arg10[%c0_23, %c0_24], %26 {strides = array<i32>} : memref<152x128xf32, #tpu.memory_space<vmem>>, vector<152x128xf32>,
    return
  }
  func.func @transform_0(%arg0: i32) -> (i32, i32) {
    %c0_i32 = arith.constant 0 : i32
    %c0_i32_0 = arith.constant 0 : i32
    return %arg0, %c0_i32 : i32, i32
  }
  func.func @transform_1(%arg0: i32) -> (i32, i32) {
    %c0_i32 = arith.constant 0 : i32
    %c0_i32_0 = arith.constant 0 : i32
    %c0_i32_1 = arith.constant 0 : i32
    return %c0_i32, %c0_i32_0 : i32, i32
  }
  func.func @transform_2(%arg0: i32) -> (i32, i32) {
    %c0_i32 = arith.constant 0 : i32
    %c0_i32_0 = arith.constant 0 : i32
    %c0_i32_1 = arith.constant 0 : i32
    return %c0_i32, %c0_i32_0 : i32, i32
  }
  func.func @transform_3(%arg0: i32) -> (i32, i32) {
    %c0_i32 = arith.constant 0 : i32
    %c0_i32_0 = arith.constant 0 : i32
    %c0_i32_1 = arith.constant 0 : i32
    return %c0_i32, %c0_i32_0 : i32, i32
  }
  func.func @transform_4(%arg0: i32) -> (i32, i32) {
    %c0_i32 = arith.constant 0 : i32
    %c0_i32_0 = arith.constant 0 : i32
    %c0_i32_1 = arith.constant 0 : i32
    return %c0_i32, %c0_i32_0 : i32, i32
  }
  func.func @transform_5(%arg0: i32) -> (i32, i32) {
    %c0_i32 = arith.constant 0 : i32
    %c0_i32_0 = arith.constant 0 : i32
    %c0_i32_1 = arith.constant 0 : i32
    return %c0_i32, %c0_i32_0 : i32, i32
  }
  func.func @transform_6(%arg0: i32) -> (i32, i32) {
    %c0_i32 = arith.constant 0 : i32
    %c0_i32_0 = arith.constant 0 : i32
    %c0_i32_1 = arith.constant 0 : i32
    return %c0_i32, %c0_i32_0 : i32, i32
  }
  func.func @transform_7(%arg0: i32) -> (i32, i32) {
    %c0_i32 = arith.constant 0 : i32
    %c0_i32_0 = arith.constant 0 : i32
    %c0_i32_1 = arith.constant 0 : i32
    return %c0_i32, %c0_i32_0 : i32, i32
  }
  func.func @transform_8(%arg0: i32) -> (i32, i32) {
    %c0_i32 = arith.constant 0 : i32
    %c0_i32_0 = arith.constant 0 : i32
    %c0_i32_1 = arith.constant 0 : i32
    return %c0_i32, %c0_i32_0 : i32, i32
  }
  func.func @transform_9(%arg0: i32) -> (i32, i32) {
    %c0_i32 = arith.constant 0 : i32
    %c0_i32_0 = arith.constant 0 : i32
    return %arg0, %c0_i32 : i32, i32
  }
}

</mosaic_0001>

<llo_original>
// kernel: tpu_custom_call.1
$region0: #{tpu_custom_call.1}
  #allocation0 [shape = 'u32[]', space=smem, size = 0x4, offset = 0x4, fixed_abs, tag = 'smem constant byte address 0x4 - core index']
  #allocation1 [shape = 'u32[144,128]{1,0:T(1,128)}', space=vmem, size = 0x12000, scoped, tag = 'internal scratch']
  %s0 = inlined_call_operand.hbm [shape: f32[300,784], index: 0, kind: input, shape index: {}]
  %s1 = inlined_call_operand.hbm [shape: f32[784,128], index: 1, kind: input, shape index: {}]
  %s2 = inlined_call_operand.hbm [shape: f32[1,128], index: 2, kind: input, shape index: {}]
  %s3 = inlined_call_operand.vmem [shape: f32[128,64], index: 3, kind: input, shape index: {}]
  %s4 = inlined_call_operand.hbm [shape: f32[1,64], index: 4, kind: input, shape index: {}]
  %s5 = inlined_call_operand.vmem [shape: f32[64,8], index: 5, kind: input, shape index: {}]
  %s6 = inlined_call_operand.hbm [shape: f32[1,8], index: 6, kind: input, shape index: {}]
  %s7 = inlined_call_operand.hbm [shape: f32[8,128], index: 7, kind: input, shape index: {}]
  %s8 = inlined_call_operand.hbm [shape: f32[1,128], index: 8, kind: input, shape index: {}]
  %s9 = inlined_call_operand.hbm [shape: f32[300,128], index: 9, kind: output, shape index: {}]
  %s10 = sld [smem:[#allocation0]]
  $region97: #{tpu_custom_call.1} parent=0
    _
  %s12 = ssub.s32 1, %s10
  %s13 = scalar_select 0, %s12, %s10
  $region1: #{tpu_custom_call.1} parent=0
    #allocation2 [shape = 'u8[1089536]{0}', space=vmem, size = 0x10a000, scoped, tag = 'input window, operand 0']
    #allocation3 [shape = 's32[2]{0}', space=sflag, size = 0x8, scoped, tag = 'scoped memory for tpu_custom_call.1']
    #allocation4 [shape = 's32[2]{0}', space=sflag, size = 0x8, scoped, tag = 'scoped memory for tpu_custom_call.1']
    #allocation5 [shape = 'u8[401408]{0}', space=vmem, size = 0x62000, scoped, tag = 'input window, operand 1, single buffered']
    #allocation6 [shape = 's32[1]{0}', space=sflag, size = 0x4, scoped, tag = 'scoped memory for tpu_custom_call.1']
    #allocation7 [shape = 'u8[512]{0}', space=vmem, size = 0x400, scoped, tag = 'input window, operand 2, single buffered']
    #allocation8 [shape = 'u8[512]{0}', space=vmem, size = 0x400, scoped, tag = 'input window, operand 4, single buffered']
    #allocation9 [shape = 's32[1]{0}', space=sflag, size = 0x4, scoped, tag = 'scoped memory for tpu_custom_call.1']
    #allocation10 [shape = 'u8[512]{0}', space=vmem, size = 0x400, scoped, tag = 'input window, operand 6, single buffered']
    #allocation11 [shape = 'u8[4096]{0}', space=vmem, size = 0x1000, scoped, tag = 'input window, operand 7, single buffered']
    #allocation12 [shape = 's32[1]{0}', space=sflag, size = 0x4, scoped, tag = 'scoped memory for tpu_custom_call.1']
    #allocation13 [shape = 'u8[512]{0}', space=vmem, size = 0x400, scoped, tag = 'input window, operand 8, single buffered']
    #allocation14 [shape = 'u8[155648]{0}', space=vmem, size = 0x26000, scoped, tag = 'output window, operand 0']
    %14 = vsyncpa [#allocation3], 0
    %s15 = scalar_lea.sflag [#allocation3], 1
    %16 = vsyncpa %s15, 0
    %17 = vsyncpa [#allocation6], 0
    %18 = vsyncpa [#allocation9], 0
    %19 = vsyncpa [#allocation12], 0
    %20 = vsyncpa [#allocation4], 0
    %s21 = scalar_lea.sflag [#allocation4], 1
    %22 = vsyncpa %s21, 0
    loop: start=0, step=1, limit=4
    $region2: #{tpu_custom_call.1} parent=1 // loop_pre_header
      _
    $region3: #{tpu_custom_call.1} parent=1 // loop_header
      %s24 = sphi 0, %s28
      %p25 = scmp.ge.s32.totalorder %s24, 4
      %s34 = sphi 0, %s36
      %s37 = sphi 0, %s34
      %s38 = sphi 0, %s37
      %s54 = sphi 0, %s38
      %s58 = sphi 0, %s58
      %s60 = sphi 0, %s58
      %s61 = sphi 0, %s60
      %s75 = sphi 0, %s61
      %s79 = sphi 0, %s79
      %s81 = sphi 0, %s79
      %s82 = sphi 0, %s81
      %s96 = sphi 0, %s82
      %s100 = sphi 0, %s100
      %s102 = sphi 0, %s100
      %s103 = sphi 0, %s102
      %s117 = sphi 0, %s103
      %s121 = sphi 0, %s121
      %s123 = sphi 0, %s121
      %s124 = sphi 0, %s123
      %s138 = sphi 0, %s124
      %s142 = sphi 0, %s142
      %s144 = sphi 0, %s142
      %s145 = sphi 0, %s144
      %s159 = sphi 0, %s145
      %s163 = sphi 0, %s163
      %s165 = sphi 0, %s163
      %s166 = sphi 0, %s165
      %s180 = sphi 0, %s166
      %s184 = sphi 0, %s184
      %s186 = sphi 0, %s184
      %s187 = sphi 0, %s186
      %s201 = sphi 0, %s187
      %s205 = sphi 0, %s205
      %s207 = sphi 0, %s205
      %s208 = sphi 0, %s207
      %s222 = sphi 0, %s208
      %s228 = sphi 0, %s230
      %s231 = sphi 0, %s228
      %s232 = sphi 0, %s231
      %s248 = sphi 0, %s232
    $region4: #{tpu_custom_call.1} parent=1 // loop_header_branch
      %27 = sbr.rel (%p25) target = $region8
    $region5: #{tpu_custom_call.1} parent=1 // loop_body
      %s29 = ssub.s32 %s24, 1
      %s30 = ssub.s32 %s24, 2
      %s31 = sadd.s32 %s24, 1
      %s32 = ssub.s32 %s24, %s31
      %p33 = scmp.eq.s32.totalorder %s32, 0
      %s35 = sadd.s32 %s34, 1
      %s36 = scalar_select %p33, %s34, %s35
      %p39 = pneg %p33
      %p40 = scmp.eq.s32.totalorder %s24, 1
      %p41 = por %p39, %p40
      %p42 = scmp.ne.s32.totalorder %s34, %s37
      %p43 = scmp.eq.s32.totalorder %s24, 0
      %p44 = por %p42, %p43
      %p45 = scmp.ne.s32.totalorder %s34, %s37
      %p46 = scmp.eq.s32.totalorder %s29, 1
      %p47 = por %p45, %p46
      %p48 = scmp.ne.s32.totalorder %s37, %s38
      %p49 = scmp.eq.s32.totalorder %s29, 0
      %p50 = por %p48, %p49
      %p51 = scmp.ne.s32.totalorder %s37, %s38
      %p52 = scmp.eq.s32.totalorder %s30, 1
      %p53 = por %p51, %p52
      %p55 = scmp.ne.s32.totalorder %s38, %s54
      %p56 = scmp.eq.s32.totalorder %s30, 0
      %p57 = por %p55, %p56
      %s59 = sadd.s32 %s58, 1
      %p62 = scmp.eq.s32.totalorder %s24, 1
      %p63 = scmp.ne.s32.totalorder %s58, %s60
      %p64 = scmp.eq.s32.totalorder %s24, 0
      %p65 = por %p63, %p64
      %p66 = scmp.ne.s32.totalorder %s58, %s60
      %p67 = scmp.eq.s32.totalorder %s29, 1
      %p68 = por %p66, %p67
      %p69 = scmp.ne.s32.totalorder %s60, %s61
      %p70 = scmp.eq.s32.totalorder %s29, 0
      %p71 = por %p69, %p70
      %p72 = scmp.ne.s32.totalorder %s60, %s61
      %p73 = scmp.eq.s32.totalorder %s30, 1
      %p74 = por %p72, %p73
      %p76 = scmp.ne.s32.totalorder %s61, %s75
      %p77 = scmp.eq.s32.totalorder %s30, 0
      %p78 = por %p76, %p77
      %s80 = sadd.s32 %s79, 1
      %p83 = scmp.eq.s32.totalorder %s24, 1
      %p84 = scmp.ne.s32.totalorder %s79, %s81
      %p85 = scmp.eq.s32.totalorder %s24, 0
      %p86 = por %p84, %p85
      %p87 = scmp.ne.s32.totalorder %s79, %s81
      %p88 = scmp.eq.s32.totalorder %s29, 1
      %p89 = por %p87, %p88
      %p90 = scmp.ne.s32.totalorder %s81, %s82
      %p91 = scmp.eq.s32.totalorder %s29, 0
      %p92 = por %p90, %p91
      %p93 = scmp.ne.s32.totalorder %s81, %s82
      %p94 = scmp.eq.s32.totalorder %s30, 1
      %p95 = por %p93, %p94
      %p97 = scmp.ne.s32.totalorder %s82, %s96
      %p98 = scmp.eq.s32.totalorder %s30, 0
      %p99 = por %p97, %p98
      %s101 = sadd.s32 %s100, 1
      %p104 = scmp.eq.s32.totalorder %s24, 1
      %p105 = scmp.ne.s32.totalorder %s100, %s102
      %p106 = scmp.eq.s32.totalorder %s24, 0
      %p107 = por %p105, %p106
      %p108 = scmp.ne.s32.totalorder %s100, %s102
      %p109 = scmp.eq.s32.totalorder %s29, 1
      %p110 = por %p108, %p109
      %p111 = scmp.ne.s32.totalorder %s102, %s103
      %p112 = scmp.eq.s32.totalorder %s29, 0
      %p113 = por %p111, %p112
      %p114 = scmp.ne.s32.totalorder %s102, %s103
      %p115 = scmp.eq.s32.totalorder %s30, 1
      %p116 = por %p114, %p115
      %p118 = scmp.ne.s32.totalorder %s103, %s117
      %p119 = scmp.eq.s32.totalorder %s30, 0
      %p120 = por %p118, %p119
      %s122 = sadd.s32 %s121, 1
      %p125 = scmp.eq.s32.totalorder %s24, 1
      %p126 = scmp.ne.s32.totalorder %s121, %s123
      %p127 = scmp.eq.s32.totalorder %s24, 0
      %p128 = por %p126, %p127
      %p129 = scmp.ne.s32.totalorder %s121, %s123
      %p130 = scmp.eq.s32.totalorder %s29, 1
      %p131 = por %p129, %p130
      %p132 = scmp.ne.s32.totalorder %s123, %s124
      %p133 = scmp.eq.s32.totalorder %s29, 0
      %p134 = por %p132, %p133
      %p135 = scmp.ne.s32.totalorder %s123, %s124
      %p136 = scmp.eq.s32.totalorder %s30, 1
      %p137 = por %p135, %p136
      %p139 = scmp.ne.s32.totalorder %s124, %s138
      %p140 = scmp.eq.s32.totalorder %s30, 0
      %p141 = por %p139, %p140
      %s143 = sadd.s32 %s142, 1
      %p146 = scmp.eq.s32.totalorder %s24, 1
      %p147 = scmp.ne.s32.totalorder %s142, %s144
      %p148 = scmp.eq.s32.totalorder %s24, 0
      %p149 = por %p147, %p148
      %p150 = scmp.ne.s32.totalorder %s142, %s144
      %p151 = scmp.eq.s32.totalorder %s29, 1
      %p152 = por %p150, %p151
      %p153 = scmp.ne.s32.totalorder %s144, %s145
      %p154 = scmp.eq.s32.totalorder %s29, 0
      %p155 = por %p153, %p154
      %p156 = scmp.ne.s32.totalorder %s144, %s145
      %p157 = scmp.eq.s32.totalorder %s30, 1
      %p158 = por %p156, %p157
      %p160 = scmp.ne.s32.totalorder %s145, %s159
      %p161 = scmp.eq.s32.totalorder %s30, 0
      %p162 = por %p160, %p161
      %s164 = sadd.s32 %s163, 1
      %p167 = scmp.eq.s32.totalorder %s24, 1
      %p168 = scmp.ne.s32.totalorder %s163, %s165
      %p169 = scmp.eq.s32.totalorder %s24, 0
      %p170 = por %p168, %p169
      %p171 = scmp.ne.s32.totalorder %s163, %s165
      %p172 = scmp.eq.s32.totalorder %s29, 1
      %p173 = por %p171, %p172
      %p174 = scmp.ne.s32.totalorder %s165, %s166
      %p175 = scmp.eq.s32.totalorder %s29, 0
      %p176 = por %p174, %p175
      %p177 = scmp.ne.s32.totalorder %s165, %s166
      %p178 = scmp.eq.s32.totalorder %s30, 1
      %p179 = por %p177, %p178
      %p181 = scmp.ne.s32.totalorder %s166, %s180
      %p182 = scmp.eq.s32.totalorder %s30, 0
      %p183 = por %p181, %p182
      %s185 = sadd.s32 %s184, 1
      %p188 = scmp.eq.s32.totalorder %s24, 1
      %p189 = scmp.ne.s32.totalorder %s184, %s186
      %p190 = scmp.eq.s32.totalorder %s24, 0
      %p191 = por %p189, %p190
      %p192 = scmp.ne.s32.totalorder %s184, %s186
      %p193 = scmp.eq.s32.totalorder %s29, 1
      %p194 = por %p192, %p193
      %p195 = scmp.ne.s32.totalorder %s186, %s187
      %p196 = scmp.eq.s32.totalorder %s29, 0
      %p197 = por %p195, %p196
      %p198 = scmp.ne.s32.totalorder %s186, %s187
      %p199 = scmp.eq.s32.totalorder %s30, 1
      %p200 = por %p198, %p199
      %p202 = scmp.ne.s32.totalorder %s187, %s201
      %p203 = scmp.eq.s32.totalorder %s30, 0
      %p204 = por %p202, %p203
      %s206 = sadd.s32 %s205, 1
      %p209 = scmp.eq.s32.totalorder %s24, 1
      %p210 = scmp.ne.s32.totalorder %s205, %s207
      %p211 = scmp.eq.s32.totalorder %s24, 0
      %p212 = por %p210, %p211
      %p213 = scmp.ne.s32.totalorder %s205, %s207
      %p214 = scmp.eq.s32.totalorder %s29, 1
      %p215 = por %p213, %p214
      %p216 = scmp.ne.s32.totalorder %s207, %s208
      %p217 = scmp.eq.s32.totalorder %s29, 0
      %p218 = por %p216, %p217
      %p219 = scmp.ne.s32.totalorder %s207, %s208
      %p220 = scmp.eq.s32.totalorder %s30, 1
      %p221 = por %p219, %p220
      %p223 = scmp.ne.s32.totalorder %s208, %s222
      %p224 = scmp.eq.s32.totalorder %s30, 0
      %p225 = por %p223, %p224
      %s226 = ssub.s32 %s24, %s31
      %p227 = scmp.eq.s32.totalorder %s226, 0
      %s229 = sadd.s32 %s228, 1
      %s230 = scalar_select %p227, %s228, %s229
      %p233 = pneg %p227
      %p234 = scmp.eq.s32.totalorder %s24, 1
      %p235 = por %p233, %p234
      %p236 = scmp.ne.s32.totalorder %s228, %s231
      %p237 = scmp.eq.s32.totalorder %s24, 0
      %p238 = por %p236, %p237
      %p239 = scmp.ne.s32.totalorder %s228, %s231
      %p240 = scmp.eq.s32.totalorder %s29, 1
      %p241 = por %p239, %p240
      %p242 = scmp.ne.s32.totalorder %s231, %s232
      %p243 = scmp.eq.s32.totalorder %s29, 0
      %p244 = por %p242, %p243
      %p245 = scmp.ne.s32.totalorder %s231, %s232
      %p246 = scmp.eq.s32.totalorder %s30, 1
      %p247 = por %p245, %p246
      %p249 = scmp.ne.s32.totalorder %s232, %s248
      %p250 = scmp.eq.s32.totalorder %s30, 0
      %p251 = por %p249, %p250
      %p252 = scmp.le.s32.totalorder 1, %s24
      %p253 = scmp.lt.s32.totalorder %s24, 3
      %p254 = pnand %p252, %p253
      %p255 = pneg %p254
      // Predicated region
      $region9: #{tpu_custom_call.1} parent=5 // pred_check
        _
      $region10: #{tpu_custom_call.1} parent=5 // pred_check_branch
        %257 = sbr.rel (%p254) target = $region12
      $region11: #{tpu_custom_call.1} parent=5 // pred_region
        %s258 = ssub.s32 %s24, 1
        // Predicated region
        $region13: #{tpu_custom_call.1} parent=11 // pred_check
          %p259 = pneg %p71
        $region14: #{tpu_custom_call.1} parent=11 // pred_check_branch
          %261 = sbr.rel (%p259) target = $region16
        $region15: #{tpu_custom_call.1} parent=11 // pred_region
          %s263 = ssub.s32 12544, 12544
          %264 = vsyncadd [#allocation6], %s263
          %s265 = sshll.u32 [#allocation5], 4
          %s266 = int_to_ptr.vmem [resolvable:$true] %s265
          %271 = dma.hbm_to_vmem [thread:$0]  %s1, 12544, %s266, [#allocation6], 128, 128, 8
        $region16: #{tpu_custom_call.1} parent=11 // pred_fallthru
          _
        // Predicated region
        $region17: #{tpu_custom_call.1} parent=11 // pred_check
          %p272 = pneg %p92
        $region18: #{tpu_custom_call.1} parent=11 // pred_check_branch
          %274 = sbr.rel (%p272) target = $region20
        $region19: #{tpu_custom_call.1} parent=11 // pred_region
          %s276 = ssub.s32 16, 16
          %277 = vsyncadd [#allocation6], %s276
          %s279 = sshll.u32 [#allocation7], 4
          %s280 = int_to_ptr.vmem [resolvable:$true] %s279
          %282 = dma.hbm_to_vmem [thread:$0]  %s2, 16, %s280, [#allocation6]
        $region20: #{tpu_custom_call.1} parent=11 // pred_fallthru
          _
        // Predicated region
        $region21: #{tpu_custom_call.1} parent=11 // pred_check
          %p283 = pneg %p113
        $region22: #{tpu_custom_call.1} parent=11 // pred_check_branch
          %285 = sbr.rel (%p283) target = $region24
        $region23: #{tpu_custom_call.1} parent=11 // pred_region
          _
        $region24: #{tpu_custom_call.1} parent=11 // pred_fallthru
          _
        // Predicated region
        $region25: #{tpu_custom_call.1} parent=11 // pred_check
          %p286 = pneg %p134
        $region26: #{tpu_custom_call.1} parent=11 // pred_check_branch
          %288 = sbr.rel (%p286) target = $region28
        $region27: #{tpu_custom_call.1} parent=11 // pred_region
          %s290 = ssub.s32 16, 16
          %291 = vsyncadd [#allocation9], %s290
          %s293 = sshll.u32 [#allocation8], 4
          %s294 = int_to_ptr.vmem [resolvable:$true] %s293
          %296 = dma.hbm_to_vmem [thread:$0]  %s4, 16, %s294, [#allocation9]
        $region28: #{tpu_custom_call.1} parent=11 // pred_fallthru
          _
        // Predicated region
        $region29: #{tpu_custom_call.1} parent=11 // pred_check
          %p297 = pneg %p155
        $region30: #{tpu_custom_call.1} parent=11 // pred_check_branch
          %299 = sbr.rel (%p297) target = $region32
        $region31: #{tpu_custom_call.1} parent=11 // pred_region
          _
        $region32: #{tpu_custom_call.1} parent=11 // pred_fallthru
          _
        // Predicated region
        $region33: #{tpu_custom_call.1} parent=11 // pred_check
          %p300 = pneg %p176
        $region34: #{tpu_custom_call.1} parent=11 // pred_check_branch
          %302 = sbr.rel (%p300) target = $region36
        $region35: #{tpu_custom_call.1} parent=11 // pred_region
          %s304 = ssub.s32 16, 16
          %305 = vsyncadd [#allocation9], %s304
          %s307 = sshll.u32 [#allocation10], 4
          %s308 = int_to_ptr.vmem [resolvable:$true] %s307
          %310 = dma.hbm_to_vmem [thread:$0]  %s6, 16, %s308, [#allocation9]
        $region36: #{tpu_custom_call.1} parent=11 // pred_fallthru
          _
        // Predicated region
        $region37: #{tpu_custom_call.1} parent=11 // pred_check
          %p311 = pneg %p197
        $region38: #{tpu_custom_call.1} parent=11 // pred_check_branch
          %313 = sbr.rel (%p311) target = $region40
        $region39: #{tpu_custom_call.1} parent=11 // pred_region
          %s315 = ssub.s32 128, 128
          %316 = vsyncadd [#allocation12], %s315
          %s318 = sshll.u32 [#allocation11], 4
          %s319 = int_to_ptr.vmem [resolvable:$true] %s318
          %321 = dma.hbm_to_vmem [thread:$0]  %s7, 128, %s319, [#allocation12]
        $region40: #{tpu_custom_call.1} parent=11 // pred_fallthru
          _
        // Predicated region
        $region41: #{tpu_custom_call.1} parent=11 // pred_check
          %p322 = pneg %p218
        $region42: #{tpu_custom_call.1} parent=11 // pred_check_branch
          %324 = sbr.rel (%p322) target = $region44
        $region43: #{tpu_custom_call.1} parent=11 // pred_region
          %s326 = ssub.s32 16, 16
          %327 = vsyncadd [#allocation12], %s326
          %s329 = sshll.u32 [#allocation13], 4
          %s330 = int_to_ptr.vmem [resolvable:$true] %s329
          %332 = dma.hbm_to_vmem [thread:$0]  %s8, 16, %s330, [#allocation12]
        $region44: #{tpu_custom_call.1} parent=11 // pred_fallthru
          _
      $region12: #{tpu_custom_call.1} parent=5 // pred_fallthru
        _
      %p333 = scmp.lt.s32.totalorder %s24, 2
      // Predicated region
      $region45: #{tpu_custom_call.1} parent=5 // pred_check
        %p334 = pneg %p333
      $region46: #{tpu_custom_call.1} parent=5 // pred_check_branch
        %336 = sbr.rel (%p334) target = $region48
      $region47: #{tpu_custom_call.1} parent=5 // pred_region
        // Predicated region
        $region49: #{tpu_custom_call.1} parent=47 // pred_check
          %p337 = pneg %p44
        $region50: #{tpu_custom_call.1} parent=47 // pred_check_branch
          %339 = sbr.rel (%p337) target = $region52
        $region51: #{tpu_custom_call.1} parent=47 // pred_region
          %s340 = sand.u32 %s34, 1
          %s341 = scalar_lea.sflag [#allocation3], %s340
          %s342 = sand.u32 %s34, 1
          %s343 = smul.addr %s342, 1064
          %s344 = scalar_lea.vmem [#allocation2], %s343
          %s345 = smul.u32 19, %s24
          %s347 = ssub.s32 17024, 17024
          %348 = vsyncadd %s341, %s347
          %s349 = smul.addr %s345, 7
          %s350 = smul.addr %s349, 128
          %s351 = scalar_lea.hbm %s0, %s350
          %s352 = sshll.u32 %s344, 4
          %s353 = int_to_ptr.vmem [resolvable:$true] %s352
          %358 = dma.hbm_to_vmem [thread:$0]  %s351, 17024, %s353, %s341, 896, 896, 56
        $region52: #{tpu_custom_call.1} parent=47 // pred_fallthru
          _
      $region48: #{tpu_custom_call.1} parent=5 // pred_fallthru
        _
      %p359 = scmp.le.s32.totalorder 1, %s24
      %p360 = scmp.lt.s32.totalorder %s24, 3
      %p361 = pnand %p359, %p360
      %p362 = pneg %p361
      // Predicated region
      $region53: #{tpu_custom_call.1} parent=5 // pred_check
        _
      $region54: #{tpu_custom_call.1} parent=5 // pred_check_branch
        %364 = sbr.rel (%p361) target = $region56
      $region55: #{tpu_custom_call.1} parent=5 // pred_region
        %s365 = ssub.s32 %s24, 1
        %s366 = sand.u32 %s37, 1
        %s367 = scalar_lea.sflag [#allocation3], %s366
        %s368 = sand.u32 %s37, 1
        %s369 = smul.addr %s368, 1064
        %s370 = scalar_lea.vmem [#allocation2], %s369
        // Predicated region
        $region57: #{tpu_custom_call.1} parent=55 // pred_check
          %p371 = pneg %p50
        $region58: #{tpu_custom_call.1} parent=55 // pred_check_branch
          %373 = sbr.rel (%p371) target = $region60
        $region59: #{tpu_custom_call.1} parent=55 // pred_region
          %374 = dma.done %s367, 17024
        $region60: #{tpu_custom_call.1} parent=55 // pred_fallthru
          _
        // Predicated region
        $region61: #{tpu_custom_call.1} parent=55 // pred_check
          %p375 = pneg %p71
        $region62: #{tpu_custom_call.1} parent=55 // pred_check_branch
          %377 = sbr.rel (%p375) target = $region64
        $region63: #{tpu_custom_call.1} parent=55 // pred_region
          %378 = dma.done [#allocation6], 12544
        $region64: #{tpu_custom_call.1} parent=55 // pred_fallthru
          _
        // Predicated region
        $region65: #{tpu_custom_call.1} parent=55 // pred_check
          %p379 = pneg %p92
        $region66: #{tpu_custom_call.1} parent=55 // pred_check_branch
          %381 = sbr.rel (%p379) target = $region68
        $region67: #{tpu_custom_call.1} parent=55 // pred_region
          %382 = dma.done [#allocation6], 16
        $region68: #{tpu_custom_call.1} parent=55 // pred_fallthru
          _
        // Predicated region
        $region69: #{tpu_custom_call.1} parent=55 // pred_check
          %p383 = pneg %p134
        $region70: #{tpu_custom_call.1} parent=55 // pred_check_branch
          %385 = sbr.rel (%p383) target = $region72
        $region71: #{tpu_custom_call.1} parent=55 // pred_region
          %386 = dma.done [#allocation9], 16
        $region72: #{tpu_custom_call.1} parent=55 // pred_fallthru
          _
        // Predicated region
        $region73: #{tpu_custom_call.1} parent=55 // pred_check
          %p387 = pneg %p176
        $region74: #{tpu_custom_call.1} parent=55 // pred_check_branch
          %389 = sbr.rel (%p387) target = $region76
        $region75: #{tpu_custom_call.1} parent=55 // pred_region
          %390 = dma.done [#allocation9], 16
        $region76: #{tpu_custom_call.1} parent=55 // pred_fallthru
          _
        // Predicated region
        $region77: #{tpu_custom_call.1} parent=55 // pred_check
          %p391 = pneg %p197
        $region78: #{tpu_custom_call.1} parent=55 // pred_check_branch
          %393 = sbr.rel (%p391) target = $region80
        $region79: #{tpu_custom_call.1} parent=55 // pred_region
          %394 = dma.done [#allocation12], 128
        $region80: #{tpu_custom_call.1} parent=55 // pred_fallthru
          _
        // Predicated region
        $region81: #{tpu_custom_call.1} parent=55 // pred_check
          %p395 = pneg %p218
        $region82: #{tpu_custom_call.1} parent=55 // pred_check_branch
          %397 = sbr.rel (%p395) target = $region84
        $region83: #{tpu_custom_call.1} parent=55 // pred_region
          %398 = dma.done [#allocation12], 16
        $region84: #{tpu_custom_call.1} parent=55 // pred_fallthru
          _
        %s399 = sand.u32 %s37, 1
        %s400 = scalar_lea.sflag [#allocation3], %s399
        %s401 = sand.u32 %s37, 1
        %s402 = smul.addr %s401, 1064
        %s403 = scalar_lea.vmem [#allocation2], %s402
        %p404 = pneg %p50
        %p405 = pneg %p47
        %p406 = pneg %p71
        %p407 = pneg %p68
        %p408 = pneg %p92
        %p409 = pneg %p89
        %p410 = pneg %p113
        %p411 = pneg %p110
        %p412 = pneg %p134
        %p413 = pneg %p131
        %p414 = pneg %p155
        %p415 = pneg %p152
        %p416 = pneg %p176
        %p417 = pneg %p173
        %p418 = pneg %p197
        %p419 = pneg %p194
        %p420 = pneg %p218
        %p421 = pneg %p215
        %p422 = pneg %p244
        %p423 = pneg %p241
        %s424 = sand.u32 %s231, 1
        %s425 = scalar_lea.sflag [#allocation4], %s424
        %s426 = sand.u32 %s231, 1
        %s427 = smul.addr %s426, 152
        %s428 = scalar_lea.vmem [#allocation14], %s427
        %s429 = smul.u32 19, %s29
        %s430 = smul.u32 19, %s29
        %v431 = vld [vmem:[%s370] sm:$0xff]
        %v432 = vld [vmem:[%s370 + $0x8] sm:$0xff]
        %v433 = vld [vmem:[%s370 + $0x10] sm:$0xff]
        %v434 = vld [vmem:[%s370 + $0x18] sm:$0xff]
        %v435 = vld [vmem:[%s370 + $0x20] sm:$0xff]
        %v436 = vld [vmem:[%s370 + $0x28] sm:$0xff]
        %v437 = vld [vmem:[%s370 + $0x30] sm:$0xff]
        %v438 = vld [vmem:[%s370 + $0x38] sm:$0xff]
        %v439 = vld [vmem:[%s370 + $0x40] sm:$0xff]
        %v440 = vld [vmem:[%s370 + $0x48] sm:$0xff]
        %v441 = vld [vmem:[%s370 + $0x50] sm:$0xff]
        %v442 = vld [vmem:[%s370 + $0x58] sm:$0xff]
        %v443 = vld [vmem:[%s370 + $0x60] sm:$0xff]
        %v444 = vld [vmem:[%s370 + $0x68] sm:$0xff]
        %v445 = vld [vmem:[%s370 + $0x70] sm:$0xff]
        %v446 = vld [vmem:[%s370 + $0x78] sm:$0xff]
        %v447 = vld [vmem:[%s370 + $0x80] sm:$0xff]
        %v448 = vld [vmem:[%s370 + $0x88] sm:$0xff]
        %v449 = vld [vmem:[%s370 + $0x90] sm:$0xff]
        %v450 = vld [vmem:[%s370 + $0x98] sm:$0xff]
        %v451 = vld [vmem:[%s370 + $0xa0] sm:$0xff]
        %v452 = vld [vmem:[%s370 + $0xa8] sm:$0xff]
        %v453 = vld [vmem:[%s370 + $0xb0] sm:$0xff]
        %v454 = vld [vmem:[%s370 + $0xb8] sm:$0xff]
        %v455 = vld [vmem:[%s370 + $0xc0] sm:$0xff]
        %v456 = vld [vmem:[%s370 + $0xc8] sm:$0xff]
        %v457 = vld [vmem:[%s370 + $0xd0] sm:$0xff]
        %v458 = vld [vmem:[%s370 + $0xd8] sm:$0xff]
        %v459 = vld [vmem:[%s370 + $0xe0] sm:$0xff]
        %v460 = vld [vmem:[%s370 + $0xe8] sm:$0xff]
        %v461 = vld [vmem:[%s370 + $0xf0] sm:$0xff]
        %v462 = vld [vmem:[%s370 + $0xf8] sm:$0xff]
        %v463 = vld [vmem:[%s370 + $0x100] sm:$0xff]
        %v464 = vld [vmem:[%s370 + $0x108] sm:$0xff]
        %v465 = vld [vmem:[%s370 + $0x110] sm:$0xff]
        %v466 = vld [vmem:[%s370 + $0x118] sm:$0xff]
        %v467 = vld [vmem:[%s370 + $0x120] sm:$0xff]
        %v468 = vld [vmem:[%s370 + $0x128] sm:$0xff]
        %v469 = vld [vmem:[%s370 + $0x130] sm:$0xff]
        %v470 = vld [vmem:[%s370 + $0x138] sm:$0xff]
        %v471 = vld [vmem:[%s370 + $0x140] sm:$0xff]
        %v472 = vld [vmem:[%s370 + $0x148] sm:$0xff]
        %v473 = vld [vmem:[%s370 + $0x150] sm:$0xff]
        %v474 = vld [vmem:[%s370 + $0x158] sm:$0xff]
        %v475 = vld [vmem:[%s370 + $0x160] sm:$0xff]
        %v476 = vld [vmem:[%s370 + $0x168] sm:$0xff]
        %v477 = vld [vmem:[%s370 + $0x170] sm:$0xff]
        %v478 = vld [vmem:[%s370 + $0x178] sm:$0xff]
        %v479 = vld [vmem:[%s370 + $0x180] sm:$0xff]
        %v480 = vld [vmem:[%s370 + $0x188] sm:$0xff]
        %v481 = vld [vmem:[%s370 + $0x190] sm:$0xff]
        %v482 = vld [vmem:[%s370 + $0x198] sm:$0xff]
        %v483 = vld [vmem:[%s370 + $0x1a0] sm:$0xff]
        %v484 = vld [vmem:[%s370 + $0x1a8] sm:$0xff]
        %v485 = vld [vmem:[%s370 + $0x1b0] sm:$0xff]
        %v486 = vld [vmem:[%s370 + $0x1b8] sm:$0xff]
        %v487 = vld [vmem:[%s370 + $0x1c0] sm:$0xff]
        %v488 = vld [vmem:[%s370 + $0x1c8] sm:$0xff]
        %v489 = vld [vmem:[%s370 + $0x1d0] sm:$0xff]
        %v490 = vld [vmem:[%s370 + $0x1d8] sm:$0xff]
        %v491 = vld [vmem:[%s370 + $0x1e0] sm:$0xff]
        %v492 = vld [vmem:[%s370 + $0x1e8] sm:$0xff]
        %v493 = vld [vmem:[%s370 + $0x1f0] sm:$0xff]
        %v494 = vld [vmem:[%s370 + $0x1f8] sm:$0xff]
        %v495 = vld [vmem:[%s370 + $0x200] sm:$0xff]
        %v496 = vld [vmem:[%s370 + $0x208] sm:$0xff]
        %v497 = vld [vmem:[%s370 + $0x210] sm:$0xff]
        %v498 = vld [vmem:[%s370 + $0x218] sm:$0xff]
        %v499 = vld [vmem:[%s370 + $0x220] sm:$0xff]
        %v500 = vld [vmem:[%s370 + $0x228] sm:$0xff]
        %v501 = vld [vmem:[%s370 + $0x230] sm:$0xff]
        %v502 = vld [vmem:[%s370 + $0x238] sm:$0xff]
        %v503 = vld [vmem:[%s370 + $0x240] sm:$0xff]
        %v504 = vld [vmem:[%s370 + $0x248] sm:$0xff]
        %v505 = vld [vmem:[%s370 + $0x250] sm:$0xff]
        %v506 = vld [vmem:[%s370 + $0x258] sm:$0xff]
        %v507 = vld [vmem:[%s370 + $0x260] sm:$0xff]
        %v508 = vld [vmem:[%s370 + $0x268] sm:$0xff]
        %v509 = vld [vmem:[%s370 + $0x270] sm:$0xff]
        %v510 = vld [vmem:[%s370 + $0x278] sm:$0xff]
        %v511 = vld [vmem:[%s370 + $0x280] sm:$0xff]
        %v512 = vld [vmem:[%s370 + $0x288] sm:$0xff]
        %v513 = vld [vmem:[%s370 + $0x290] sm:$0xff]
        %v514 = vld [vmem:[%s370 + $0x298] sm:$0xff]
        %v515 = vld [vmem:[%s370 + $0x2a0] sm:$0xff]
        %v516 = vld [vmem:[%s370 + $0x2a8] sm:$0xff]
        %v517 = vld [vmem:[%s370 + $0x2b0] sm:$0xff]
        %v518 = vld [vmem:[%s370 + $0x2b8] sm:$0xff]
        %v519 = vld [vmem:[%s370 + $0x2c0] sm:$0xff]
        %v520 = vld [vmem:[%s370 + $0x2c8] sm:$0xff]
        %v521 = vld [vmem:[%s370 + $0x2d0] sm:$0xff]
        %v522 = vld [vmem:[%s370 + $0x2d8] sm:$0xff]
        %v523 = vld [vmem:[%s370 + $0x2e0] sm:$0xff]
        %v524 = vld [vmem:[%s370 + $0x2e8] sm:$0xff]
        %v525 = vld [vmem:[%s370 + $0x2f0] sm:$0xff]
        %v526 = vld [vmem:[%s370 + $0x2f8] sm:$0xff]
        %v527 = vld [vmem:[%s370 + $0x300] sm:$0xff]
        %v528 = vld [vmem:[%s370 + $0x308] sm:$0xff]
        %v529 = vld [vmem:[%s370 + $0x310] sm:$0xff]
        %v530 = vld [vmem:[%s370 + $0x318] sm:$0xff]
        %v531 = vld [vmem:[%s370 + $0x320] sm:$0xff]
        %v532 = vld [vmem:[%s370 + $0x328] sm:$0xff]
        %v533 = vld [vmem:[%s370 + $0x330] sm:$0xff]
        %v534 = vld [vmem:[%s370 + $0x338] sm:$0xff]
        %v535 = vld [vmem:[%s370 + $0x340] sm:$0xff]
        %v536 = vld [vmem:[%s370 + $0x348] sm:$0xff]
        %v537 = vld [vmem:[%s370 + $0x350] sm:$0xff]
        %v538 = vld [vmem:[%s370 + $0x358] sm:$0xff]
        %v539 = vld [vmem:[%s370 + $0x360] sm:$0xff]
        %v540 = vld [vmem:[%s370 + $0x368] sm:$0xff]
        %v541 = vld [vmem:[%s370 + $0x370] sm:$0xff]
        %v542 = vld [vmem:[%s370 + $0x378] sm:$0xff]
        %v543 = vld [vmem:[%s370 + $0x380] sm:$0xff]
        %v544 = vld [vmem:[%s370 + $0x388] sm:$0xff]
        %v545 = vld [vmem:[%s370 + $0x390] sm:$0xff]
        %v546 = vld [vmem:[%s370 + $0x398] sm:$0xff]
        %v547 = vld [vmem:[%s370 + $0x3a0] sm:$0xff]
        %v548 = vld [vmem:[%s370 + $0x3a8] sm:$0xff]
        %v549 = vld [vmem:[%s370 + $0x3b0] sm:$0xff]
        %v550 = vld [vmem:[%s370 + $0x3b8] sm:$0xff]
        %v551 = vld [vmem:[%s370 + $0x3c0] sm:$0xff]
        %v552 = vld [vmem:[%s370 + $0x3c8] sm:$0xff]
        %v553 = vld [vmem:[%s370 + $0x3d0] sm:$0xff]
        %v554 = vld [vmem:[%s370 + $0x3d8] sm:$0xff]
        %v555 = vld [vmem:[%s370 + $0x3e0] sm:$0xff]
        %v556 = vld [vmem:[%s370 + $0x3e8] sm:$0xff]
        %v557 = vld [vmem:[%s370 + $0x3f0] sm:$0xff]
        %v558 = vld [vmem:[%s370 + $0x3f8] sm:$0xff]
        %v559 = vld [vmem:[%s370 + $0x400] sm:$0xff]
        %v560 = vld [vmem:[%s370 + $0x408] sm:$0xff]
        %v561 = vld [vmem:[%s370 + $0x410] sm:$0xff]
        %v562 = vld [vmem:[%s370 + $0x418] sm:$0xff]
        %v563 = vld [vmem:[%s370 + $0x420] sm:$0xff]
        %v564 = vld [vmem:[#allocation5] sm:$0xff]
        %v565 = vld [vmem:[#allocation5 + $0x8] sm:$0xff]
        %v566 = vld [vmem:[#allocation5 + $0x10] sm:$0xff]
        %v567 = vld [vmem:[#allocation5 + $0x18] sm:$0xff]
        %v568 = vld [vmem:[#allocation5 + $0x20] sm:$0xff]
        %v569 = vld [vmem:[#allocation5 + $0x28] sm:$0xff]
        %v570 = vld [vmem:[#allocation5 + $0x30] sm:$0xff]
        %v571 = vld [vmem:[#allocation5 + $0x38] sm:$0xff]
        %v572 = vld [vmem:[#allocation5 + $0x40] sm:$0xff]
        %v573 = vld [vmem:[#allocation5 + $0x48] sm:$0xff]
        %v574 = vld [vmem:[#allocation5 + $0x50] sm:$0xff]
        %v575 = vld [vmem:[#allocation5 + $0x58] sm:$0xff]
        %v576 = vld [vmem:[#allocation5 + $0x60] sm:$0xff]
        %v577 = vld [vmem:[#allocation5 + $0x68] sm:$0xff]
        %v578 = vld [vmem:[#allocation5 + $0x70] sm:$0xff]
        %v579 = vld [vmem:[#allocation5 + $0x78] sm:$0xff]
        %v580 = vld [vmem:[#allocation5 + $0x80] sm:$0xff]
        %v581 = vld [vmem:[#allocation5 + $0x88] sm:$0xff]
        %v582 = vld [vmem:[#allocation5 + $0x90] sm:$0xff]
        %v583 = vld [vmem:[#allocation5 + $0x98] sm:$0xff]
        %v584 = vld [vmem:[#allocation5 + $0xa0] sm:$0xff]
        %v585 = vld [vmem:[#allocation5 + $0xa8] sm:$0xff]
        %v586 = vld [vmem:[#allocation5 + $0xb0] sm:$0xff]
        %v587 = vld [vmem:[#allocation5 + $0xb8] sm:$0xff]
        %v588 = vld [vmem:[#allocation5 + $0xc0] sm:$0xff]
        %v589 = vld [vmem:[#allocation5 + $0xc8] sm:$0xff]
        %v590 = vld [vmem:[#allocation5 + $0xd0] sm:$0xff]
        %v591 = vld [vmem:[#allocation5 + $0xd8] sm:$0xff]
        %v592 = vld [vmem:[#allocation5 + $0xe0] sm:$0xff]
        %v593 = vld [vmem:[#allocation5 + $0xe8] sm:$0xff]
        %v594 = vld [vmem:[#allocation5 + $0xf0] sm:$0xff]
        %v595 = vld [vmem:[#allocation5 + $0xf8] sm:$0xff]
        %v596 = vld [vmem:[#allocation5 + $0x100] sm:$0xff]
        %v597 = vld [vmem:[#allocation5 + $0x108] sm:$0xff]
        %v598 = vld [vmem:[#allocation5 + $0x110] sm:$0xff]
        %v599 = vld [vmem:[#allocation5 + $0x118] sm:$0xff]
        %v600 = vld [vmem:[#allocation5 + $0x120] sm:$0xff]
        %v601 = vld [vmem:[#allocation5 + $0x128] sm:$0xff]
        %v602 = vld [vmem:[#allocation5 + $0x130] sm:$0xff]
        %v603 = vld [vmem:[#allocation5 + $0x138] sm:$0xff]
        %v604 = vld [vmem:[#allocation5 + $0x140] sm:$0xff]
        %v605 = vld [vmem:[#allocation5 + $0x148] sm:$0xff]
        %v606 = vld [vmem:[#allocation5 + $0x150] sm:$0xff]
        %v607 = vld [vmem:[#allocation5 + $0x158] sm:$0xff]
        %v608 = vld [vmem:[#allocation5 + $0x160] sm:$0xff]
        %v609 = vld [vmem:[#allocation5 + $0x168] sm:$0xff]
        %v610 = vld [vmem:[#allocation5 + $0x170] sm:$0xff]
        %v611 = vld [vmem:[#allocation5 + $0x178] sm:$0xff]
        %v612 = vld [vmem:[#allocation5 + $0x180] sm:$0xff]
        %v613 = vld [vmem:[#allocation5 + $0x188] sm:$0xff]
        %v614 = vld [vmem:[#allocation5 + $0x190] sm:$0xff]
        %v615 = vld [vmem:[#allocation5 + $0x198] sm:$0xff]
        %v616 = vld [vmem:[#allocation5 + $0x1a0] sm:$0xff]
        %v617 = vld [vmem:[#allocation5 + $0x1a8] sm:$0xff]
        %v618 = vld [vmem:[#allocation5 + $0x1b0] sm:$0xff]
        %v619 = vld [vmem:[#allocation5 + $0x1b8] sm:$0xff]
        %v620 = vld [vmem:[#allocation5 + $0x1c0] sm:$0xff]
        %v621 = vld [vmem:[#allocation5 + $0x1c8] sm:$0xff]
        %v622 = vld [vmem:[#allocation5 + $0x1d0] sm:$0xff]
        %v623 = vld [vmem:[#allocation5 + $0x1d8] sm:$0xff]
        %v624 = vld [vmem:[#allocation5 + $0x1e0] sm:$0xff]
        %v625 = vld [vmem:[#allocation5 + $0x1e8] sm:$0xff]
        %v626 = vld [vmem:[#allocation5 + $0x1f0] sm:$0xff]
        %v627 = vld [vmem:[#allocation5 + $0x1f8] sm:$0xff]
        %v628 = vld [vmem:[#allocation5 + $0x200] sm:$0xff]
        %v629 = vld [vmem:[#allocation5 + $0x208] sm:$0xff]
        %v630 = vld [vmem:[#allocation5 + $0x210] sm:$0xff]
        %v631 = vld [vmem:[#allocation5 + $0x218] sm:$0xff]
        %v632 = vld [vmem:[#allocation5 + $0x220] sm:$0xff]
        %v633 = vld [vmem:[#allocation5 + $0x228] sm:$0xff]
        %v634 = vld [vmem:[#allocation5 + $0x230] sm:$0xff]
        %v635 = vld [vmem:[#allocation5 + $0x238] sm:$0xff]
        %v636 = vld [vmem:[#allocation5 + $0x240] sm:$0xff]
        %v637 = vld [vmem:[#allocation5 + $0x248] sm:$0xff]
        %v638 = vld [vmem:[#allocation5 + $0x250] sm:$0xff]
        %v639 = vld [vmem:[#allocation5 + $0x258] sm:$0xff]
        %v640 = vld [vmem:[#allocation5 + $0x260] sm:$0xff]
        %v641 = vld [vmem:[#allocation5 + $0x268] sm:$0xff]
        %v642 = vld [vmem:[#allocation5 + $0x270] sm:$0xff]
        %v643 = vld [vmem:[#allocation5 + $0x278] sm:$0xff]
        %v644 = vld [vmem:[#allocation5 + $0x280] sm:$0xff]
        %v645 = vld [vmem:[#allocation5 + $0x288] sm:$0xff]
        %v646 = vld [vmem:[#allocation5 + $0x290] sm:$0xff]
        %v647 = vld [vmem:[#allocation5 + $0x298] sm:$0xff]
        %v648 = vld [vmem:[#allocation5 + $0x2a0] sm:$0xff]
        %v649 = vld [vmem:[#allocation5 + $0x2a8] sm:$0xff]
        %v650 = vld [vmem:[#allocation5 + $0x2b0] sm:$0xff]
        %v651 = vld [vmem:[#allocation5 + $0x2b8] sm:$0xff]
        %v652 = vld [vmem:[#allocation5 + $0x2c0] sm:$0xff]
        %v653 = vld [vmem:[#allocation5 + $0x2c8] sm:$0xff]
        %v654 = vld [vmem:[#allocation5 + $0x2d0] sm:$0xff]
        %v655 = vld [vmem:[#allocation5 + $0x2d8] sm:$0xff]
        %v656 = vld [vmem:[#allocation5 + $0x2e0] sm:$0xff]
        %v657 = vld [vmem:[#allocation5 + $0x2e8] sm:$0xff]
        %v658 = vld [vmem:[#allocation5 + $0x2f0] sm:$0xff]
        %v659 = vld [vmem:[#allocation5 + $0x2f8] sm:$0xff]
        %v660 = vld [vmem:[#allocation5 + $0x300] sm:$0xff]
        %v661 = vld [vmem:[#allocation5 + $0x308] sm:$0xff]
        %v662 = vld [vmem:[#allocation7] sm:$0x1]
        %v664 = vlaneseq
        %v665 = vshrl.u32 %v664, 7
        %v666 = vsub.s32 0, %v665
        %v667 = vrot.slane %v662, %v666
        %vm669 = vcmask 130048
        %v671 = vsel %vm669, %v437, 0
        %v674 = vsel %vm669, %v444, 0
        %v677 = vsel %vm669, %v451, 0
        %v680 = vsel %vm669, %v458, 0
        %v683 = vsel %vm669, %v465, 0
        %v686 = vsel %vm669, %v472, 0
        %v689 = vsel %vm669, %v479, 0
        %v692 = vsel %vm669, %v486, 0
        %v695 = vsel %vm669, %v493, 0
        %v698 = vsel %vm669, %v500, 0
        %v701 = vsel %vm669, %v507, 0
        %v704 = vsel %vm669, %v514, 0
        %v707 = vsel %vm669, %v521, 0
        %v710 = vsel %vm669, %v528, 0
        %v713 = vsel %vm669, %v535, 0
        %v716 = vsel %vm669, %v542, 0
        %v719 = vsel %vm669, %v549, 0
        %v722 = vsel %vm669, %v556, 0
        %v725 = vsel %vm669, %v563, 0
        %727 = vmatprep.subr.mxu0 0.0
        %728 = vmatpush1.msra.mxu0 %v564
        %729 = vmatprep.subr.mxu0 0.0
        %730 = vmatpush1.msra.mxu0 %v565
        %731 = vmatprep.subr.mxu0 0.0
        %732 = vmatpush1.msra.mxu0 %v566
        %733 = vmatprep.subr.mxu0 0.0
        %734 = vmatpush1.msra.mxu0 %v567
        %735 = vmatprep.subr.mxu0 0.0
        %736 = vmatpush1.msra.mxu0 %v568
        %737 = vmatprep.subr.mxu0 0.0
        %738 = vmatpush1.msra.mxu0 %v569
        %739 = vmatprep.subr.mxu0 0.0
        %740 = vmatpush1.msra.mxu0 %v570
        %741 = vmatprep.subr.mxu0 0.0
        %742 = vmatpush1.msra.mxu0 %v571
        %743 = vmatprep.subr.mxu0 0.0
        %744 = vmatpush1.msra.mxu0 %v572
        %745 = vmatprep.subr.mxu0 0.0
        %746 = vmatpush1.msra.mxu0 %v573
        %747 = vmatprep.subr.mxu0 0.0
        %748 = vmatpush1.msra.mxu0 %v574
        %749 = vmatprep.subr.mxu0 0.0
        %750 = vmatpush1.msra.mxu0 %v575
        %751 = vmatprep.subr.mxu0 0.0
        %752 = vmatpush1.msra.mxu0 %v576
        %753 = vmatprep.subr.mxu0 0.0
        %754 = vmatpush1.msra.mxu0 %v577
        %755 = vmatprep.subr.mxu0 0.0
        %756 = vmatpush1.msra.mxu0 %v578
        %757 = vmatprep.subr.mxu0 0.0
        %758 = vmatpush1.msra.mxu0 %v579
        %759 = vmatprep.subr.mxu0 0.0
        %760 = vmatpush1.msra.mxu0 %v580
        %761 = vmatprep.subr.mxu0 0.0
        %762 = vmatpush1.msra.mxu0 %v581
        %763 = vmatprep.subr.mxu0 0.0
        %764 = vmatpush1.msra.mxu0 %v582
        %765 = vmatprep.subr.mxu0 0.0
        %766 = vmatpush1.msra.mxu0 %v583
        %767 = vmatprep.subr.mxu0 0.0
        %768 = vmatpush1.msra.mxu0 %v584
        %769 = vmatprep.subr.mxu0 0.0
        %770 = vmatpush1.msra.mxu0 %v585
        %771 = vmatprep.subr.mxu0 0.0
        %772 = vmatpush1.msra.mxu0 %v586
        %773 = vmatprep.subr.mxu0 0.0
        %774 = vmatpush1.msra.mxu0 %v587
        %775 = vmatprep.subr.mxu0 0.0
        %776 = vmatpush1.msra.mxu0 %v588
        %777 = vmatprep.subr.mxu0 0.0
        %778 = vmatpush1.msra.mxu0 %v589
        %779 = vmatprep.subr.mxu0 0.0
        %780 = vmatpush1.msra.mxu0 %v590
        %781 = vmatprep.subr.mxu0 0.0
        %782 = vmatpush1.msra.mxu0 %v591
        %783 = vmatprep.subr.mxu0 0.0
        %784 = vmatpush1.msra.mxu0 %v592
        %785 = vmatprep.subr.mxu0 0.0
        %786 = vmatpush1.msra.mxu0 %v593
        %787 = vmatprep.subr.mxu0 0.0
        %788 = vmatpush1.msra.mxu0 %v594
        %789 = vmatprep.subr.mxu0 0.0
        %790 = vmatpush1.msra.mxu0 %v595
        %791 = vmatprep.mubr.f32.mxu0 %v432
        %792 = vmatmul.mubr.f32.gmra.mrb[0].mxu0 %v431
        %v793 = vpop.f32.mrb[0].mxu0
        %v794 = vadd.f32 %v667, %v793
        %v795 = vpop.f32.mrb[0].mxu0
        %796 = vmatprep.mubr.f32.mxu0 %v439
        %797 = vmatmul.mubr.f32.gmra.mrb[0].mxu0 %v438
        %v798 = vpop.f32.mrb[0].mxu0
        %v799 = vadd.f32 %v667, %v798
        %v800 = vpop.f32.mrb[0].mxu0
        %801 = vmatprep.mubr.f32.mxu0 %v446
        %802 = vmatmul.mubr.f32.gmra.mrb[0].mxu0 %v445
        %v803 = vpop.f32.mrb[0].mxu0
        %v804 = vadd.f32 %v667, %v803
        %v805 = vpop.f32.mrb[0].mxu0
        %806 = vmatprep.mubr.f32.mxu0 %v453
        %807 = vmatmul.mubr.f32.gmra.mrb[0].mxu0 %v452
        %v808 = vpop.f32.mrb[0].mxu0
        %v809 = vadd.f32 %v667, %v808
        %v810 = vpop.f32.mrb[0].mxu0
        %811 = vmatprep.mubr.f32.mxu0 %v460
        %812 = vmatmul.mubr.f32.gmra.mrb[0].mxu0 %v459
        %v813 = vpop.f32.mrb[0].mxu0
        %v814 = vadd.f32 %v667, %v813
        %v815 = vpop.f32.mrb[0].mxu0
        %816 = vmatprep.mubr.f32.mxu0 %v467
        %817 = vmatmul.mubr.f32.gmra.mrb[0].mxu0 %v466
        %v818 = vpop.f32.mrb[0].mxu0
        %v819 = vadd.f32 %v667, %v818
        %v820 = vpop.f32.mrb[0].mxu0
        %821 = vmatprep.mubr.f32.mxu0 %v474
        %822 = vmatmul.mubr.f32.gmra.mrb[0].mxu0 %v473
        %v823 = vpop.f32.mrb[0].mxu0
        %v824 = vadd.f32 %v667, %v823
        %v825 = vpop.f32.mrb[0].mxu0
        %826 = vmatprep.mubr.f32.mxu0 %v481
        %827 = vmatmul.mubr.f32.gmra.mrb[0].mxu0 %v480
        %v828 = vpop.f32.mrb[0].mxu0
        %v829 = vadd.f32 %v667, %v828
        %v830 = vpop.f32.mrb[0].mxu0
        %831 = vmatprep.mubr.f32.mxu0 %v488
        %832 = vmatmul.mubr.f32.gmra.mrb[0].mxu0 %v487
        %v833 = vpop.f32.mrb[0].mxu0
        %v834 = vadd.f32 %v667, %v833
        %v835 = vpop.f32.mrb[0].mxu0
        %836 = vmatprep.mubr.f32.mxu0 %v495
        %837 = vmatmul.mubr.f32.gmra.mrb[0].mxu0 %v494
        %v838 = vpop.f32.mrb[0].mxu0
        %v839 = vadd.f32 %v667, %v838
        %v840 = vpop.f32.mrb[0].mxu0
        %841 = vmatprep.mubr.f32.mxu0 %v502
        %842 = vmatmul.mubr.f32.gmra.mrb[0].mxu0 %v501
        %v843 = vpop.f32.mrb[0].mxu0
        %v844 = vadd.f32 %v667, %v843
        %v845 = vpop.f32.mrb[0].mxu0
        %846 = vmatprep.mubr.f32.mxu0 %v509
        %847 = vmatmul.mubr.f32.gmra.mrb[0].mxu0 %v508
        %v848 = vpop.f32.mrb[0].mxu0
        %v849 = vadd.f32 %v667, %v848
        %v850 = vpop.f32.mrb[0].mxu0
        %851 = vmatprep.mubr.f32.mxu0 %v516
        %852 = vmatmul.mubr.f32.gmra.mrb[0].mxu0 %v515
        %v853 = vpop.f32.mrb[0].mxu0
        %v854 = vadd.f32 %v667, %v853
        %v855 = vpop.f32.mrb[0].mxu0
        %856 = vmatprep.mubr.f32.mxu0 %v523
        %857 = vmatmul.mubr.f32.gmra.mrb[0].mxu0 %v522
        %v858 = vpop.f32.mrb[0].mxu0
        %v859 = vadd.f32 %v667, %v858
        %v860 = vpop.f32.mrb[0].mxu0
        %861 = vmatprep.mubr.f32.mxu0 %v530
        %862 = vmatmul.mubr.f32.gmra.mrb[0].mxu0 %v529
        %v863 = vpop.f32.mrb[0].mxu0
        %v864 = vadd.f32 %v667, %v863
        %v865 = vpop.f32.mrb[0].mxu0
        %866 = vmatprep.mubr.f32.mxu0 %v537
        %867 = vmatmul.mubr.f32.gmra.mrb[0].mxu0 %v536
        %v868 = vpop.f32.mrb[0].mxu0
        %v869 = vadd.f32 %v667, %v868
        %v870 = vpop.f32.mrb[0].mxu0
        %871 = vmatprep.mubr.f32.mxu0 %v544
        %872 = vmatmul.mubr.f32.gmra.mrb[0].mxu0 %v543
        %v873 = vpop.f32.mrb[0].mxu0
        %v874 = vadd.f32 %v667, %v873
        %v875 = vpop.f32.mrb[0].mxu0
        %876 = vmatprep.mubr.f32.mxu0 %v551
        %877 = vmatmul.mubr.f32.gmra.mrb[0].mxu0 %v550
        %v878 = vpop.f32.mrb[0].mxu0
        %v879 = vadd.f32 %v667, %v878
        %v880 = vpop.f32.mrb[0].mxu0
        %881 = vmatprep.mubr.f32.mxu0 %v558
        %882 = vmatmul.mubr.f32.gmra.mrb[0].mxu0 %v557
        %v883 = vpop.f32.mrb[0].mxu0
        %v884 = vadd.f32 %v667, %v883
        %v885 = vpop.f32.mrb[0].mxu0
        %886 = vdwg.mxu0
        %887 = vmatprep.subr.mxu0 0.0
        %888 = vmatpush1.msra.mxu0 %v596
        %889 = vmatprep.subr.mxu0 0.0
        %890 = vmatpush1.msra.mxu0 %v597
        %891 = vmatprep.subr.mxu0 0.0
        %892 = vmatpush1.msra.mxu0 %v598
        %893 = vmatprep.subr.mxu0 0.0
        %894 = vmatpush1.msra.mxu0 %v599
        %895 = vmatprep.subr.mxu0 0.0
        %896 = vmatpush1.msra.mxu0 %v600
        %897 = vmatprep.subr.mxu0 0.0
        %898 = vmatpush1.msra.mxu0 %v601
        %899 = vmatprep.subr.mxu0 0.0
        %900 = vmatpush1.msra.mxu0 %v602
        %901 = vmatprep.subr.mxu0 0.0
        %902 = vmatpush1.msra.mxu0 %v603
        %903 = vmatprep.subr.mxu0 0.0
        %904 = vmatpush1.msra.mxu0 %v604
        %905 = vmatprep.subr.mxu0 0.0
        %906 = vmatpush1.msra.mxu0 %v605
        %907 = vmatprep.subr.mxu0 0.0
        %908 = vmatpush1.msra.mxu0 %v606
        %909 = vmatprep.subr.mxu0 0.0
        %910 = vmatpush1.msra.mxu0 %v607
        %911 = vmatprep.subr.mxu0 0.0
        %912 = vmatpush1.msra.mxu0 %v608
        %913 = vmatprep.subr.mxu0 0.0
        %914 = vmatpush1.msra.mxu0 %v609
        %915 = vmatprep.subr.mxu0 0.0
        %916 = vmatpush1.msra.mxu0 %v610
        %917 = vmatprep.subr.mxu0 0.0
        %918 = vmatpush1.msra.mxu0 %v611
        %919 = vmatprep.subr.mxu0 0.0
        %920 = vmatpush1.msra.mxu0 %v612
        %921 = vmatprep.subr.mxu0 0.0
        %922 = vmatpush1.msra.mxu0 %v613
        %923 = vmatprep.subr.mxu0 0.0
        %924 = vmatpush1.msra.mxu0 %v614
        %925 = vmatprep.subr.mxu0 0.0
        %926 = vmatpush1.msra.mxu0 %v615
        %927 = vmatprep.subr.mxu0 0.0
        %928 = vmatpush1.msra.mxu0 %v616
        %929 = vmatprep.subr.mxu0 0.0
        %930 = vmatpush1.msra.mxu0 %v617
        %931 = vmatprep.subr.mxu0 0.0
        %932 = vmatpush1.msra.mxu0 %v618
        %933 = vmatprep.subr.mxu0 0.0
        %934 = vmatpush1.msra.mxu0 %v619
        %935 = vmatprep.subr.mxu0 0.0
        %936 = vmatpush1.msra.mxu0 %v620
        %937 = vmatprep.subr.mxu0 0.0
        %938 = vmatpush1.msra.mxu0 %v621
        %939 = vmatprep.subr.mxu0 0.0
        %940 = vmatpush1.msra.mxu0 %v622
        %941 = vmatprep.subr.mxu0 0.0
        %942 = vmatpush1.msra.mxu0 %v623
        %943 = vmatprep.subr.mxu0 0.0
        %944 = vmatpush1.msra.mxu0 %v624
        %945 = vmatprep.subr.mxu0 0.0
        %946 = vmatpush1.msra.mxu0 %v625
        %947 = vmatprep.subr.mxu0 0.0
        %948 = vmatpush1.msra.mxu0 %v626
        %949 = vmatprep.subr.mxu0 0.0
        %950 = vmatpush1.msra.mxu0 %v627
        %951 = vmatprep.mubr.f32.mxu0 %v434
        %952 = vmatmul.mubr.f32.gmra.mrb[0].mxu0 %v433
        %v953 = vpop.f32.mrb[0].mxu0
        %v954 = vadd.f32 %v794, %v953
        %v955 = vpop.f32.mrb[0].mxu0
        %956 = vmatprep.mubr.f32.mxu0 %v441
        %957 = vmatmul.mubr.f32.gmra.mrb[0].mxu0 %v440
        %v958 = vpop.f32.mrb[0].mxu0
        %v959 = vadd.f32 %v799, %v958
        %v960 = vpop.f32.mrb[0].mxu0
        %961 = vmatprep.mubr.f32.mxu0 %v448
        %962 = vmatmul.mubr.f32.gmra.mrb[0].mxu0 %v447
        %v963 = vpop.f32.mrb[0].mxu0
        %v964 = vadd.f32 %v804, %v963
        %v965 = vpop.f32.mrb[0].mxu0
        %966 = vmatprep.mubr.f32.mxu0 %v455
        %967 = vmatmul.mubr.f32.gmra.mrb[0].mxu0 %v454
        %v968 = vpop.f32.mrb[0].mxu0
        %v969 = vadd.f32 %v809, %v968
        %v970 = vpop.f32.mrb[0].mxu0
        %971 = vmatprep.mubr.f32.mxu0 %v462
        %972 = vmatmul.mubr.f32.gmra.mrb[0].mxu0 %v461
        %v973 = vpop.f32.mrb[0].mxu0
        %v974 = vadd.f32 %v814, %v973
        %v975 = vpop.f32.mrb[0].mxu0
        %976 = vmatprep.mubr.f32.mxu0 %v469
        %977 = vmatmul.mubr.f32.gmra.mrb[0].mxu0 %v468
        %v978 = vpop.f32.mrb[0].mxu0
        %v979 = vadd.f32 %v819, %v978
        %v980 = vpop.f32.mrb[0].mxu0
        %981 = vmatprep.mubr.f32.mxu0 %v476
        %982 = vmatmul.mubr.f32.gmra.mrb[0].mxu0 %v475
        %v983 = vpop.f32.mrb[0].mxu0
        %v984 = vadd.f32 %v824, %v983
        %v985 = vpop.f32.mrb[0].mxu0
        %986 = vmatprep.mubr.f32.mxu0 %v483
        %987 = vmatmul.mubr.f32.gmra.mrb[0].mxu0 %v482
        %v988 = vpop.f32.mrb[0].mxu0
        %v989 = vadd.f32 %v829, %v988
        %v990 = vpop.f32.mrb[0].mxu0
        %991 = vmatprep.mubr.f32.mxu0 %v490
        %992 = vmatmul.mubr.f32.gmra.mrb[0].mxu0 %v489
        %v993 = vpop.f32.mrb[0].mxu0
        %v994 = vadd.f32 %v834, %v993
        %v995 = vpop.f32.mrb[0].mxu0
        %996 = vmatprep.mubr.f32.mxu0 %v497
        %997 = vmatmul.mubr.f32.gmra.mrb[0].mxu0 %v496
        %v998 = vpop.f32.mrb[0].mxu0
        %v999 = vadd.f32 %v839, %v998
        %v1000 = vpop.f32.mrb[0].mxu0
        %1001 = vmatprep.mubr.f32.mxu0 %v504
        %1002 = vmatmul.mubr.f32.gmra.mrb[0].mxu0 %v503
        %v1003 = vpop.f32.mrb[0].mxu0
        %v1004 = vadd.f32 %v844, %v1003
        %v1005 = vpop.f32.mrb[0].mxu0
        %1006 = vmatprep.mubr.f32.mxu0 %v511
        %1007 = vmatmul.mubr.f32.gmra.mrb[0].mxu0 %v510
        %v1008 = vpop.f32.mrb[0].mxu0
        %v1009 = vadd.f32 %v849, %v1008
        %v1010 = vpop.f32.mrb[0].mxu0
        %1011 = vmatprep.mubr.f32.mxu0 %v518
        %1012 = vmatmul.mubr.f32.gmra.mrb[0].mxu0 %v517
        %v1013 = vpop.f32.mrb[0].mxu0
        %v1014 = vadd.f32 %v854, %v1013
        %v1015 = vpop.f32.mrb[0].mxu0
        %1016 = vmatprep.mubr.f32.mxu0 %v525
        %1017 = vmatmul.mubr.f32.gmra.mrb[0].mxu0 %v524
        %v1018 = vpop.f32.mrb[0].mxu0
        %v1019 = vadd.f32 %v859, %v1018
        %v1020 = vpop.f32.mrb[0].mxu0
        %1021 = vmatprep.mubr.f32.mxu0 %v532
        %1022 = vmatmul.mubr.f32.gmra.mrb[0].mxu0 %v531
        %v1023 = vpop.f32.mrb[0].mxu0
        %v1024 = vadd.f32 %v864, %v1023
        %v1025 = vpop.f32.mrb[0].mxu0
        %1026 = vmatprep.mubr.f32.mxu0 %v539
        %1027 = vmatmul.mubr.f32.gmra.mrb[0].mxu0 %v538
        %v1028 = vpop.f32.mrb[0].mxu0
        %v1029 = vadd.f32 %v869, %v1028
        %v1030 = vpop.f32.mrb[0].mxu0
        %1031 = vmatprep.mubr.f32.mxu0 %v546
        %1032 = vmatmul.mubr.f32.gmra.mrb[0].mxu0 %v545
        %v1033 = vpop.f32.mrb[0].mxu0
        %v1034 = vadd.f32 %v874, %v1033
        %v1035 = vpop.f32.mrb[0].mxu0
        %1036 = vmatprep.mubr.f32.mxu0 %v553
        %1037 = vmatmul.mubr.f32.gmra.mrb[0].mxu0 %v552
        %v1038 = vpop.f32.mrb[0].mxu0
        %v1039 = vadd.f32 %v879, %v1038
        %v1040 = vpop.f32.mrb[0].mxu0
        %1041 = vmatprep.mubr.f32.mxu0 %v560
        %1042 = vmatmul.mubr.f32.gmra.mrb[0].mxu0 %v559
        %v1043 = vpop.f32.mrb[0].mxu0
        %v1044 = vadd.f32 %v884, %v1043
        %v1045 = vpop.f32.mrb[0].mxu0
        %1046 = vdwg.mxu0
        %1047 = vmatprep.subr.mxu0 0.0
        %1048 = vmatpush1.msra.mxu0 %v628
        %1049 = vmatprep.subr.mxu0 0.0
        %1050 = vmatpush1.msra.mxu0 %v629
        %1051 = vmatprep.subr.mxu0 0.0
        %1052 = vmatpush1.msra.mxu0 %v630
        %1053 = vmatprep.subr.mxu0 0.0
        %1054 = vmatpush1.msra.mxu0 %v631
        %1055 = vmatprep.subr.mxu0 0.0
        %1056 = vmatpush1.msra.mxu0 %v632
        %1057 = vmatprep.subr.mxu0 0.0
        %1058 = vmatpush1.msra.mxu0 %v633
        %1059 = vmatprep.subr.mxu0 0.0
        %1060 = vmatpush1.msra.mxu0 %v634
        %1061 = vmatprep.subr.mxu0 0.0
        %1062 = vmatpush1.msra.mxu0 %v635
        %1063 = vmatprep.subr.mxu0 0.0
        %1064 = vmatpush1.msra.mxu0 %v636
        %1065 = vmatprep.subr.mxu0 0.0
        %1066 = vmatpush1.msra.mxu0 %v637
        %1067 = vmatprep.subr.mxu0 0.0
        %1068 = vmatpush1.msra.mxu0 %v638
        %1069 = vmatprep.subr.mxu0 0.0
        %1070 = vmatpush1.msra.mxu0 %v639
        %1071 = vmatprep.subr.mxu0 0.0
        %1072 = vmatpush1.msra.mxu0 %v640
        %1073 = vmatprep.subr.mxu0 0.0
        %1074 = vmatpush1.msra.mxu0 %v641
        %1075 = vmatprep.subr.mxu0 0.0
        %1076 = vmatpush1.msra.mxu0 %v642
        %1077 = vmatprep.subr.mxu0 0.0
        %1078 = vmatpush1.msra.mxu0 %v643
        %1079 = vmatprep.subr.mxu0 0.0
        %1080 = vmatpush1.msra.mxu0 %v644
        %1081 = vmatprep.subr.mxu0 0.0
        %1082 = vmatpush1.msra.mxu0 %v645
        %1083 = vmatprep.subr.mxu0 0.0
        %1084 = vmatpush1.msra.mxu0 %v646
        %1085 = vmatprep.subr.mxu0 0.0
        %1086 = vmatpush1.msra.mxu0 %v647
        %1087 = vmatprep.subr.mxu0 0.0
        %1088 = vmatpush1.msra.mxu0 %v648
        %1089 = vmatprep.subr.mxu0 0.0
        %1090 = vmatpush1.msra.mxu0 %v649
        %1091 = vmatprep.subr.mxu0 0.0
        %1092 = vmatpush1.msra.mxu0 %v650
        %1093 = vmatprep.subr.mxu0 0.0
        %1094 = vmatpush1.msra.mxu0 %v651
        %1095 = vmatprep.subr.mxu0 0.0
        %1096 = vmatpush1.msra.mxu0 %v652
        %1097 = vmatprep.subr.mxu0 0.0
        %1098 = vmatpush1.msra.mxu0 %v653
        %1099 = vmatprep.subr.mxu0 0.0
        %1100 = vmatpush1.msra.mxu0 %v654
        %1101 = vmatprep.subr.mxu0 0.0
        %1102 = vmatpush1.msra.mxu0 %v655
        %1103 = vmatprep.subr.mxu0 0.0
        %1104 = vmatpush1.msra.mxu0 %v656
        %1105 = vmatprep.subr.mxu0 0.0
        %1106 = vmatpush1.msra.mxu0 %v657
        %1107 = vmatprep.subr.mxu0 0.0
        %1108 = vmatpush1.msra.mxu0 %v658
        %1109 = vmatprep.subr.mxu0 0.0
        %1110 = vmatpush1.msra.mxu0 %v659
        %1111 = vmatprep.mubr.f32.mxu0 %v436
        %1112 = vmatmul.mubr.f32.gmra.mrb[0].mxu0 %v435
        %v1113 = vpop.f32.mrb[0].mxu0
        %v1114 = vadd.f32 %v954, %v1113
        %v1115 = vpop.f32.mrb[0].mxu0
        %1116 = vmatprep.mubr.f32.mxu0 %v443
        %1117 = vmatmul.mubr.f32.gmra.mrb[0].mxu0 %v442
        %v1118 = vpop.f32.mrb[0].mxu0
        %v1119 = vadd.f32 %v959, %v1118
        %v1120 = vpop.f32.mrb[0].mxu0
        %1121 = vmatprep.mubr.f32.mxu0 %v450
        %1122 = vmatmul.mubr.f32.gmra.mrb[0].mxu0 %v449
        %v1123 = vpop.f32.mrb[0].mxu0
        %v1124 = vadd.f32 %v964, %v1123
        %v1125 = vpop.f32.mrb[0].mxu0
        %1126 = vmatprep.mubr.f32.mxu0 %v457
        %1127 = vmatmul.mubr.f32.gmra.mrb[0].mxu0 %v456
        %v1128 = vpop.f32.mrb[0].mxu0
        %v1129 = vadd.f32 %v969, %v1128
        %v1130 = vpop.f32.mrb[0].mxu0
        %1131 = vmatprep.mubr.f32.mxu0 %v464
        %1132 = vmatmul.mubr.f32.gmra.mrb[0].mxu0 %v463
        %v1133 = vpop.f32.mrb[0].mxu0
        %v1134 = vadd.f32 %v974, %v1133
        %v1135 = vpop.f32.mrb[0].mxu0
        %1136 = vmatprep.mubr.f32.mxu0 %v471
        %1137 = vmatmul.mubr.f32.gmra.mrb[0].mxu0 %v470
        %v1138 = vpop.f32.mrb[0].mxu0
        %v1139 = vadd.f32 %v979, %v1138
        %v1140 = vpop.f32.mrb[0].mxu0
        %1141 = vmatprep.mubr.f32.mxu0 %v478
        %1142 = vmatmul.mubr.f32.gmra.mrb[0].mxu0 %v477
        %v1143 = vpop.f32.mrb[0].mxu0
        %v1144 = vadd.f32 %v984, %v1143
        %v1145 = vpop.f32.mrb[0].mxu0
        %1146 = vmatprep.mubr.f32.mxu0 %v485
        %1147 = vmatmul.mubr.f32.gmra.mrb[0].mxu0 %v484
        %v1148 = vpop.f32.mrb[0].mxu0
        %v1149 = vadd.f32 %v989, %v1148
        %v1150 = vpop.f32.mrb[0].mxu0
        %1151 = vmatprep.mubr.f32.mxu0 %v492
        %1152 = vmatmul.mubr.f32.gmra.mrb[0].mxu0 %v491
        %v1153 = vpop.f32.mrb[0].mxu0
        %v1154 = vadd.f32 %v994, %v1153
        %v1155 = vpop.f32.mrb[0].mxu0
        %1156 = vmatprep.mubr.f32.mxu0 %v499
        %1157 = vmatmul.mubr.f32.gmra.mrb[0].mxu0 %v498
        %v1158 = vpop.f32.mrb[0].mxu0
        %v1159 = vadd.f32 %v999, %v1158
        %v1160 = vpop.f32.mrb[0].mxu0
        %1161 = vmatprep.mubr.f32.mxu0 %v506
        %1162 = vmatmul.mubr.f32.gmra.mrb[0].mxu0 %v505
        %v1163 = vpop.f32.mrb[0].mxu0
        %v1164 = vadd.f32 %v1004, %v1163
        %v1165 = vpop.f32.mrb[0].mxu0
        %1166 = vmatprep.mubr.f32.mxu0 %v513
        %1167 = vmatmul.mubr.f32.gmra.mrb[0].mxu0 %v512
        %v1168 = vpop.f32.mrb[0].mxu0
        %v1169 = vadd.f32 %v1009, %v1168
        %v1170 = vpop.f32.mrb[0].mxu0
        %1171 = vmatprep.mubr.f32.mxu0 %v520
        %1172 = vmatmul.mubr.f32.gmra.mrb[0].mxu0 %v519
        %v1173 = vpop.f32.mrb[0].mxu0
        %v1174 = vadd.f32 %v1014, %v1173
        %v1175 = vpop.f32.mrb[0].mxu0
        %1176 = vmatprep.mubr.f32.mxu0 %v527
        %1177 = vmatmul.mubr.f32.gmra.mrb[0].mxu0 %v526
        %v1178 = vpop.f32.mrb[0].mxu0
        %v1179 = vadd.f32 %v1019, %v1178
        %v1180 = vpop.f32.mrb[0].mxu0
        %1181 = vmatprep.mubr.f32.mxu0 %v534
        %1182 = vmatmul.mubr.f32.gmra.mrb[0].mxu0 %v533
        %v1183 = vpop.f32.mrb[0].mxu0
        %v1184 = vadd.f32 %v1024, %v1183
        %v1185 = vpop.f32.mrb[0].mxu0
        %1186 = vmatprep.mubr.f32.mxu0 %v541
        %1187 = vmatmul.mubr.f32.gmra.mrb[0].mxu0 %v540
        %v1188 = vpop.f32.mrb[0].mxu0
        %v1189 = vadd.f32 %v1029, %v1188
        %v1190 = vpop.f32.mrb[0].mxu0
        %1191 = vmatprep.mubr.f32.mxu0 %v548
        %1192 = vmatmul.mubr.f32.gmra.mrb[0].mxu0 %v547
        %v1193 = vpop.f32.mrb[0].mxu0
        %v1194 = vadd.f32 %v1034, %v1193
        %v1195 = vpop.f32.mrb[0].mxu0
        %1196 = vmatprep.mubr.f32.mxu0 %v555
        %1197 = vmatmul.mubr.f32.gmra.mrb[0].mxu0 %v554
        %v1198 = vpop.f32.mrb[0].mxu0
        %v1199 = vadd.f32 %v1039, %v1198
        %v1200 = vpop.f32.mrb[0].mxu0
        %1201 = vmatprep.mubr.f32.mxu0 %v562
        %1202 = vmatmul.mubr.f32.gmra.mrb[0].mxu0 %v561
        %v1203 = vpop.f32.mrb[0].mxu0
        %v1204 = vadd.f32 %v1044, %v1203
        %v1205 = vpop.f32.mrb[0].mxu0
        %1206 = vdwg.mxu0
        %1207 = vmatprep.subr.mxu0 0.0
        %1208 = vmatpush1.msra.mxu0 %v660
        %1209 = vmatprep.subr.mxu0 0.0
        %1210 = vmatpush1.msra.mxu0 %v661
        %1211 = vmatprep.subr.mxu0 0.0
        %1212 = vmatpush1.msra.mxu0 0.0
        %1213 = vmatprep.subr.mxu0 0.0
        %1214 = vmatpush1.msra.mxu0 0.0
        %1215 = vmatprep.subr.mxu0 0.0
        %1216 = vmatpush1.msra.mxu0 0.0
        %1217 = vmatprep.subr.mxu0 0.0
        %1218 = vmatpush1.msra.mxu0 0.0
        %1219 = vmatprep.subr.mxu0 0.0
        %1220 = vmatpush1.msra.mxu0 0.0
        %1221 = vmatprep.subr.mxu0 0.0
        %1222 = vmatpush1.msra.mxu0 0.0
        %1223 = vmatprep.subr.mxu0 0.0
        %1224 = vmatpush1.msra.mxu0 0.0
        %1225 = vmatprep.subr.mxu0 0.0
        %1226 = vmatpush1.msra.mxu0 0.0
        %1227 = vmatprep.subr.mxu0 0.0
        %1228 = vmatpush1.msra.mxu0 0.0
        %1229 = vmatprep.subr.mxu0 0.0
        %1230 = vmatpush1.msra.mxu0 0.0
        %1231 = vmatprep.subr.mxu0 0.0
        %1232 = vmatpush1.msra.mxu0 0.0
        %1233 = vmatprep.subr.mxu0 0.0
        %1234 = vmatpush1.msra.mxu0 0.0
        %1235 = vmatprep.subr.mxu0 0.0
        %1236 = vmatpush1.msra.mxu0 0.0
        %1237 = vmatprep.subr.mxu0 0.0
        %1238 = vmatpush1.msra.mxu0 0.0
        %1239 = vmatprep.subr.mxu0 0.0
        %1240 = vmatpush1.msra.mxu0 0.0
        %1241 = vmatprep.subr.mxu0 0.0
        %1242 = vmatpush1.msra.mxu0 0.0
        %1243 = vmatprep.subr.mxu0 0.0
        %1244 = vmatpush1.msra.mxu0 0.0
        %1245 = vmatprep.subr.mxu0 0.0
        %1246 = vmatpush1.msra.mxu0 0.0
        %1247 = vmatprep.subr.mxu0 0.0
        %1248 = vmatpush1.msra.mxu0 0.0
        %1249 = vmatprep.subr.mxu0 0.0
        %1250 = vmatpush1.msra.mxu0 0.0
        %1251 = vmatprep.subr.mxu0 0.0
        %1252 = vmatpush1.msra.mxu0 0.0
        %1253 = vmatprep.subr.mxu0 0.0
        %1254 = vmatpush1.msra.mxu0 0.0
        %1255 = vmatprep.subr.mxu0 0.0
        %1256 = vmatpush1.msra.mxu0 0.0
        %1257 = vmatprep.subr.mxu0 0.0
        %1258 = vmatpush1.msra.mxu0 0.0
        %1259 = vmatprep.subr.mxu0 0.0
        %1260 = vmatpush1.msra.mxu0 0.0
        %1261 = vmatprep.subr.mxu0 0.0
        %1262 = vmatpush1.msra.mxu0 0.0
        %1263 = vmatprep.subr.mxu0 0.0
        %1264 = vmatpush1.msra.mxu0 0.0
        %1265 = vmatprep.subr.mxu0 0.0
        %1266 = vmatpush1.msra.mxu0 0.0
        %1267 = vmatprep.subr.mxu0 0.0
        %1268 = vmatpush1.msra.mxu0 0.0
        %1269 = vmatprep.subr.mxu0 0.0
        %1270 = vmatpush1.msra.mxu0 0.0
        %1271 = vmatprep.mubr.f32.mxu0 0.0
        %1272 = vmatmul.mubr.f32.gmra.mrb[0].mxu0 %v671
        %v1273 = vpop.f32.mrb[0].mxu0
        %v1274 = vadd.f32 %v1114, %v1273
        %v1275 = vpop.f32.mrb[0].mxu0
        %1276 = vmatprep.mubr.f32.mxu0 0.0
        %1277 = vmatmul.mubr.f32.gmra.mrb[0].mxu0 %v674
        %v1278 = vpop.f32.mrb[0].mxu0
        %v1279 = vadd.f32 %v1119, %v1278
        %v1280 = vpop.f32.mrb[0].mxu0
        %1281 = vmatprep.mubr.f32.mxu0 0.0
        %1282 = vmatmul.mubr.f32.gmra.mrb[0].mxu0 %v677
        %v1283 = vpop.f32.mrb[0].mxu0
        %v1284 = vadd.f32 %v1124, %v1283
        %v1285 = vpop.f32.mrb[0].mxu0
        %1286 = vmatprep.mubr.f32.mxu0 0.0
        %1287 = vmatmul.mubr.f32.gmra.mrb[0].mxu0 %v680
        %v1288 = vpop.f32.mrb[0].mxu0
        %v1289 = vadd.f32 %v1129, %v1288
        %v1290 = vpop.f32.mrb[0].mxu0
        %1291 = vmatprep.mubr.f32.mxu0 0.0
        %1292 = vmatmul.mubr.f32.gmra.mrb[0].mxu0 %v683
        %v1293 = vpop.f32.mrb[0].mxu0
        %v1294 = vadd.f32 %v1134, %v1293
        %v1295 = vpop.f32.mrb[0].mxu0
        %1296 = vmatprep.mubr.f32.mxu0 0.0
        %1297 = vmatmul.mubr.f32.gmra.mrb[0].mxu0 %v686
        %v1298 = vpop.f32.mrb[0].mxu0
        %v1299 = vadd.f32 %v1139, %v1298
        %v1300 = vpop.f32.mrb[0].mxu0
        %1301 = vmatprep.mubr.f32.mxu0 0.0
        %1302 = vmatmul.mubr.f32.gmra.mrb[0].mxu0 %v689
        %v1303 = vpop.f32.mrb[0].mxu0
        %v1304 = vadd.f32 %v1144, %v1303
        %v1305 = vpop.f32.mrb[0].mxu0
        %1306 = vmatprep.mubr.f32.mxu0 0.0
        %1307 = vmatmul.mubr.f32.gmra.mrb[0].mxu0 %v692
        %v1308 = vpop.f32.mrb[0].mxu0
        %v1309 = vadd.f32 %v1149, %v1308
        %v1310 = vpop.f32.mrb[0].mxu0
        %1311 = vmatprep.mubr.f32.mxu0 0.0
        %1312 = vmatmul.mubr.f32.gmra.mrb[0].mxu0 %v695
        %v1313 = vpop.f32.mrb[0].mxu0
        %v1314 = vadd.f32 %v1154, %v1313
        %v1315 = vpop.f32.mrb[0].mxu0
        %1316 = vmatprep.mubr.f32.mxu0 0.0
        %1317 = vmatmul.mubr.f32.gmra.mrb[0].mxu0 %v698
        %v1318 = vpop.f32.mrb[0].mxu0
        %v1319 = vadd.f32 %v1159, %v1318
        %v1320 = vpop.f32.mrb[0].mxu0
        %1321 = vmatprep.mubr.f32.mxu0 0.0
        %1322 = vmatmul.mubr.f32.gmra.mrb[0].mxu0 %v701
        %v1323 = vpop.f32.mrb[0].mxu0
        %v1324 = vadd.f32 %v1164, %v1323
        %v1325 = vpop.f32.mrb[0].mxu0
        %1326 = vmatprep.mubr.f32.mxu0 0.0
        %1327 = vmatmul.mubr.f32.gmra.mrb[0].mxu0 %v704
        %v1328 = vpop.f32.mrb[0].mxu0
        %v1329 = vadd.f32 %v1169, %v1328
        %v1330 = vpop.f32.mrb[0].mxu0
        %1331 = vmatprep.mubr.f32.mxu0 0.0
        %1332 = vmatmul.mubr.f32.gmra.mrb[0].mxu0 %v707
        %v1333 = vpop.f32.mrb[0].mxu0
        %v1334 = vadd.f32 %v1174, %v1333
        %v1335 = vpop.f32.mrb[0].mxu0
        %1336 = vmatprep.mubr.f32.mxu0 0.0
        %1337 = vmatmul.mubr.f32.gmra.mrb[0].mxu0 %v710
        %v1338 = vpop.f32.mrb[0].mxu0
        %v1339 = vadd.f32 %v1179, %v1338
        %v1340 = vpop.f32.mrb[0].mxu0
        %1341 = vmatprep.mubr.f32.mxu0 0.0
        %1342 = vmatmul.mubr.f32.gmra.mrb[0].mxu0 %v713
        %v1343 = vpop.f32.mrb[0].mxu0
        %v1344 = vadd.f32 %v1184, %v1343
        %v1345 = vpop.f32.mrb[0].mxu0
        %1346 = vmatprep.mubr.f32.mxu0 0.0
        %1347 = vmatmul.mubr.f32.gmra.mrb[0].mxu0 %v716
        %v1348 = vpop.f32.mrb[0].mxu0
        %v1349 = vadd.f32 %v1189, %v1348
        %v1350 = vpop.f32.mrb[0].mxu0
        %1351 = vmatprep.mubr.f32.mxu0 0.0
        %1352 = vmatmul.mubr.f32.gmra.mrb[0].mxu0 %v719
        %v1353 = vpop.f32.mrb[0].mxu0
        %v1354 = vadd.f32 %v1194, %v1353
        %v1355 = vpop.f32.mrb[0].mxu0
        %1356 = vmatprep.mubr.f32.mxu0 0.0
        %1357 = vmatmul.mubr.f32.gmra.mrb[0].mxu0 %v722
        %v1358 = vpop.f32.mrb[0].mxu0
        %v1359 = vadd.f32 %v1199, %v1358
        %v1360 = vpop.f32.mrb[0].mxu0
        %1361 = vmatprep.mubr.f32.mxu0 0.0
        %1362 = vmatmul.mubr.f32.gmra.mrb[0].mxu0 %v725
        %v1363 = vpop.f32.mrb[0].mxu0
        %v1364 = vadd.f32 %v1204, %v1363
        %v1365 = vpop.f32.mrb[0].mxu0
        %1366 = vdwg.mxu0
        %v1367 = vmax.f32 %v1274, 0.0
        %v1368 = vmax.f32 %v1279, 0.0
        %v1369 = vmax.f32 %v1284, 0.0
        %v1370 = vmax.f32 %v1289, 0.0
        %v1371 = vmax.f32 %v1294, 0.0
        %v1372 = vmax.f32 %v1299, 0.0
        %v1373 = vmax.f32 %v1304, 0.0
        %v1374 = vmax.f32 %v1309, 0.0
        %v1375 = vmax.f32 %v1314, 0.0
        %v1376 = vmax.f32 %v1319, 0.0
        %v1377 = vmax.f32 %v1324, 0.0
        %v1378 = vmax.f32 %v1329, 0.0
        %v1379 = vmax.f32 %v1334, 0.0
        %v1380 = vmax.f32 %v1339, 0.0
        %v1381 = vmax.f32 %v1344, 0.0
        %v1382 = vmax.f32 %v1349, 0.0
        %v1383 = vmax.f32 %v1354, 0.0
        %v1384 = vmax.f32 %v1359, 0.0
        %v1385 = vmax.f32 %v1364, 0.0
        %v1386 = vld [vmem:[%s3] sm:$0xff]
        %v1387 = vld [vmem:[%s3 + $0x8] sm:$0xff]
        %v1388 = vld [vmem:[%s3 + $0x10] sm:$0xff]
        %v1389 = vld [vmem:[%s3 + $0x18] sm:$0xff]
        %v1390 = vld [vmem:[%s3 + $0x20] sm:$0xff]
        %v1391 = vld [vmem:[%s3 + $0x28] sm:$0xff]
        %v1392 = vld [vmem:[%s3 + $0x30] sm:$0xff]
        %v1393 = vld [vmem:[%s3 + $0x38] sm:$0xff]
        %v1394 = vld [vmem:[%s3 + $0x40] sm:$0xff]
        %v1395 = vld [vmem:[%s3 + $0x48] sm:$0xff]
        %v1396 = vld [vmem:[%s3 + $0x50] sm:$0xff]
        %v1397 = vld [vmem:[%s3 + $0x58] sm:$0xff]
        %v1398 = vld [vmem:[%s3 + $0x60] sm:$0xff]
        %v1399 = vld [vmem:[%s3 + $0x68] sm:$0xff]
        %v1400 = vld [vmem:[%s3 + $0x70] sm:$0xff]
        %v1401 = vld [vmem:[%s3 + $0x78] sm:$0xff]
        %v1402 = vld [vmem:[#allocation8] sm:$0x1]
        %v1404 = vlaneseq
        %v1405 = vshrl.u32 %v1404, 7
        %v1406 = vsub.s32 0, %v1405
        %v1407 = vrot.slane %v1402, %v1406
        %1409 = vmatprep.subr.mxu0 0.0
        %1410 = vmatpush1.msra.mxu0 %v1386
        %1411 = vmatprep.subr.mxu0 0.0
        %1412 = vmatpush1.msra.mxu0 %v1387
        %1413 = vmatprep.subr.mxu0 0.0
        %1414 = vmatpush1.msra.mxu0 %v1388
        %1415 = vmatprep.subr.mxu0 0.0
        %1416 = vmatpush1.msra.mxu0 %v1389
        %1417 = vmatprep.subr.mxu0 0.0
        %1418 = vmatpush1.msra.mxu0 %v1390
        %1419 = vmatprep.subr.mxu0 0.0
        %1420 = vmatpush1.msra.mxu0 %v1391
        %1421 = vmatprep.subr.mxu0 0.0
        %1422 = vmatpush1.msra.mxu0 %v1392
        %1423 = vmatprep.subr.mxu0 0.0
        %1424 = vmatpush1.msra.mxu0 %v1393
        %1425 = vmatprep.subr.mxu0 0.0
        %1426 = vmatpush1.msra.mxu0 %v1394
        %1427 = vmatprep.subr.mxu0 0.0
        %1428 = vmatpush1.msra.mxu0 %v1395
        %1429 = vmatprep.subr.mxu0 0.0
        %1430 = vmatpush1.msra.mxu0 %v1396
        %1431 = vmatprep.subr.mxu0 0.0
        %1432 = vmatpush1.msra.mxu0 %v1397
        %1433 = vmatprep.subr.mxu0 0.0
        %1434 = vmatpush1.msra.mxu0 %v1398
        %1435 = vmatprep.subr.mxu0 0.0
        %1436 = vmatpush1.msra.mxu0 %v1399
        %1437 = vmatprep.subr.mxu0 0.0
        %1438 = vmatpush1.msra.mxu0 %v1400
        %1439 = vmatprep.subr.mxu0 0.0
        %1440 = vmatpush1.msra.mxu0 %v1401
        %1441 = vmatprep.subr.mxu0 0.0
        %1442 = vmatpush1.msra.mxu0 0.0
        %1443 = vmatprep.subr.mxu0 0.0
        %1444 = vmatpush1.msra.mxu0 0.0
        %1445 = vmatprep.subr.mxu0 0.0
        %1446 = vmatpush1.msra.mxu0 0.0
        %1447 = vmatprep.subr.mxu0 0.0
        %1448 = vmatpush1.msra.mxu0 0.0
        %1449 = vmatprep.subr.mxu0 0.0
        %1450 = vmatpush1.msra.mxu0 0.0
        %1451 = vmatprep.subr.mxu0 0.0
        %1452 = vmatpush1.msra.mxu0 0.0
        %1453 = vmatprep.subr.mxu0 0.0
        %1454 = vmatpush1.msra.mxu0 0.0
        %1455 = vmatprep.subr.mxu0 0.0
        %1456 = vmatpush1.msra.mxu0 0.0
        %1457 = vmatprep.subr.mxu0 0.0
        %1458 = vmatpush1.msra.mxu0 0.0
        %1459 = vmatprep.subr.mxu0 0.0
        %1460 = vmatpush1.msra.mxu0 0.0
        %1461 = vmatprep.subr.mxu0 0.0
        %1462 = vmatpush1.msra.mxu0 0.0
        %1463 = vmatprep.subr.mxu0 0.0
        %1464 = vmatpush1.msra.mxu0 0.0
        %1465 = vmatprep.subr.mxu0 0.0
        %1466 = vmatpush1.msra.mxu0 0.0
        %1467 = vmatprep.subr.mxu0 0.0
        %1468 = vmatpush1.msra.mxu0 0.0
        %1469 = vmatprep.subr.mxu0 0.0
        %1470 = vmatpush1.msra.mxu0 0.0
        %1471 = vmatprep.subr.mxu0 0.0
        %1472 = vmatpush1.msra.mxu0 0.0
        %1473 = vmatprep.mubr.f32.mxu0 0.0
        %1474 = vmatmul.mubr.f32.gmra.mrb[0].mxu0 %v1367
        %v1475 = vpop.f32.mrb[0].mxu0
        %v1476 = vadd.f32 %v1407, %v1475
        %v1477 = vpop.f32.mrb[0].mxu0
        %1478 = vmatprep.mubr.f32.mxu0 0.0
        %1479 = vmatmul.mubr.f32.gmra.mrb[0].mxu0 %v1368
        %v1480 = vpop.f32.mrb[0].mxu0
        %v1481 = vadd.f32 %v1407, %v1480
        %v1482 = vpop.f32.mrb[0].mxu0
        %1483 = vmatprep.mubr.f32.mxu0 0.0
        %1484 = vmatmul.mubr.f32.gmra.mrb[0].mxu0 %v1369
        %v1485 = vpop.f32.mrb[0].mxu0
        %v1486 = vadd.f32 %v1407, %v1485
        %v1487 = vpop.f32.mrb[0].mxu0
        %1488 = vmatprep.mubr.f32.mxu0 0.0
        %1489 = vmatmul.mubr.f32.gmra.mrb[0].mxu0 %v1370
        %v1490 = vpop.f32.mrb[0].mxu0
        %v1491 = vadd.f32 %v1407, %v1490
        %v1492 = vpop.f32.mrb[0].mxu0
        %1493 = vmatprep.mubr.f32.mxu0 0.0
        %1494 = vmatmul.mubr.f32.gmra.mrb[0].mxu0 %v1371
        %v1495 = vpop.f32.mrb[0].mxu0
        %v1496 = vadd.f32 %v1407, %v1495
        %v1497 = vpop.f32.mrb[0].mxu0
        %1498 = vmatprep.mubr.f32.mxu0 0.0
        %1499 = vmatmul.mubr.f32.gmra.mrb[0].mxu0 %v1372
        %v1500 = vpop.f32.mrb[0].mxu0
        %v1501 = vadd.f32 %v1407, %v1500
        %v1502 = vpop.f32.mrb[0].mxu0
        %1503 = vmatprep.mubr.f32.mxu0 0.0
        %1504 = vmatmul.mubr.f32.gmra.mrb[0].mxu0 %v1373
        %v1505 = vpop.f32.mrb[0].mxu0
        %v1506 = vadd.f32 %v1407, %v1505
        %v1507 = vpop.f32.mrb[0].mxu0
        %1508 = vmatprep.mubr.f32.mxu0 0.0
        %1509 = vmatmul.mubr.f32.gmra.mrb[0].mxu0 %v1374
        %v1510 = vpop.f32.mrb[0].mxu0
        %v1511 = vadd.f32 %v1407, %v1510
        %v1512 = vpop.f32.mrb[0].mxu0
        %1513 = vmatprep.mubr.f32.mxu0 0.0
        %1514 = vmatmul.mubr.f32.gmra.mrb[0].mxu0 %v1375
        %v1515 = vpop.f32.mrb[0].mxu0
        %v1516 = vadd.f32 %v1407, %v1515
        %v1517 = vpop.f32.mrb[0].mxu0
        %1518 = vmatprep.mubr.f32.mxu0 0.0
        %1519 = vmatmul.mubr.f32.gmra.mrb[0].mxu0 %v1376
        %v1520 = vpop.f32.mrb[0].mxu0
        %v1521 = vadd.f32 %v1407, %v1520
        %v1522 = vpop.f32.mrb[0].mxu0
        %1523 = vmatprep.mubr.f32.mxu0 0.0
        %1524 = vmatmul.mubr.f32.gmra.mrb[0].mxu0 %v1377
        %v1525 = vpop.f32.mrb[0].mxu0
        %v1526 = vadd.f32 %v1407, %v1525
        %v1527 = vpop.f32.mrb[0].mxu0
        %1528 = vmatprep.mubr.f32.mxu0 0.0
        %1529 = vmatmul.mubr.f32.gmra.mrb[0].mxu0 %v1378
        %v1530 = vpop.f32.mrb[0].mxu0
        %v1531 = vadd.f32 %v1407, %v1530
        %v1532 = vpop.f32.mrb[0].mxu0
        %1533 = vmatprep.mubr.f32.mxu0 0.0
        %1534 = vmatmul.mubr.f32.gmra.mrb[0].mxu0 %v1379
        %v1535 = vpop.f32.mrb[0].mxu0
        %v1536 = vadd.f32 %v1407, %v1535
        %v1537 = vpop.f32.mrb[0].mxu0
        %1538 = vmatprep.mubr.f32.mxu0 0.0
        %1539 = vmatmul.mubr.f32.gmra.mrb[0].mxu0 %v1380
        %v1540 = vpop.f32.mrb[0].mxu0
        %v1541 = vadd.f32 %v1407, %v1540
        %v1542 = vpop.f32.mrb[0].mxu0
        %1543 = vmatprep.mubr.f32.mxu0 0.0
        %1544 = vmatmul.mubr.f32.gmra.mrb[0].mxu0 %v1381
        %v1545 = vpop.f32.mrb[0].mxu0
        %v1546 = vadd.f32 %v1407, %v1545
        %v1547 = vpop.f32.mrb[0].mxu0
        %1548 = vmatprep.mubr.f32.mxu0 0.0
        %1549 = vmatmul.mubr.f32.gmra.mrb[0].mxu0 %v1382
        %v1550 = vpop.f32.mrb[0].mxu0
        %v1551 = vadd.f32 %v1407, %v1550
        %v1552 = vpop.f32.mrb[0].mxu0
        %1553 = vmatprep.mubr.f32.mxu0 0.0
        %1554 = vmatmul.mubr.f32.gmra.mrb[0].mxu0 %v1383
        %v1555 = vpop.f32.mrb[0].mxu0
        %v1556 = vadd.f32 %v1407, %v1555
        %v1557 = vpop.f32.mrb[0].mxu0
        %1558 = vmatprep.mubr.f32.mxu0 0.0
        %1559 = vmatmul.mubr.f32.gmra.mrb[0].mxu0 %v1384
        %v1560 = vpop.f32.mrb[0].mxu0
        %v1561 = vadd.f32 %v1407, %v1560
        %v1562 = vpop.f32.mrb[0].mxu0
        %1563 = vmatprep.mubr.f32.mxu0 0.0
        %1564 = vmatmul.mubr.f32.gmra.mrb[0].mxu0 %v1385
        %v1565 = vpop.f32.mrb[0].mxu0
        %v1566 = vadd.f32 %v1407, %v1565
        %v1567 = vpop.f32.mrb[0].mxu0
        %1568 = vdwg.mxu0
        %v1569 = vmax.f32 %v1476, 0.0
        %v1570 = vmax.f32 %v1481, 0.0
        %v1571 = vmax.f32 %v1486, 0.0
        %v1572 = vmax.f32 %v1491, 0.0
        %v1573 = vmax.f32 %v1496, 0.0
        %v1574 = vmax.f32 %v1501, 0.0
        %v1575 = vmax.f32 %v1506, 0.0
        %v1576 = vmax.f32 %v1511, 0.0
        %v1577 = vmax.f32 %v1516, 0.0
        %v1578 = vmax.f32 %v1521, 0.0
        %v1579 = vmax.f32 %v1526, 0.0
        %v1580 = vmax.f32 %v1531, 0.0
        %v1581 = vmax.f32 %v1536, 0.0
        %v1582 = vmax.f32 %v1541, 0.0
        %v1583 = vmax.f32 %v1546, 0.0
        %v1584 = vmax.f32 %v1551, 0.0
        %v1585 = vmax.f32 %v1556, 0.0
        %v1586 = vmax.f32 %v1561, 0.0
        %v1587 = vmax.f32 %v1566, 0.0
        %v1588 = vld [vmem:[%s5] sm:$0xff]
        %v1589 = vld [vmem:[%s5 + $0x8] sm:$0xff]
        %v1590 = vld [vmem:[%s5 + $0x10] sm:$0xff]
        %v1591 = vld [vmem:[%s5 + $0x18] sm:$0xff]
        %v1592 = vld [vmem:[%s5 + $0x20] sm:$0xff]
        %v1593 = vld [vmem:[%s5 + $0x28] sm:$0xff]
        %v1594 = vld [vmem:[%s5 + $0x30] sm:$0xff]
        %v1595 = vld [vmem:[%s5 + $0x38] sm:$0xff]
        %v1596 = vld [vmem:[#allocation10] sm:$0x1]
        %v1598 = vlaneseq
        %v1599 = vshrl.u32 %v1598, 7
        %v1600 = vsub.s32 0, %v1599
        %v1601 = vrot.slane %v1596, %v1600
        %vm1603 = vcmask 523264
        %v1605 = vsel %vm1603, %v1569, 0
        %v1608 = vsel %vm1603, %v1570, 0
        %v1611 = vsel %vm1603, %v1571, 0
        %v1614 = vsel %vm1603, %v1572, 0
        %v1617 = vsel %vm1603, %v1573, 0
        %v1620 = vsel %vm1603, %v1574, 0
        %v1623 = vsel %vm1603, %v1575, 0
        %v1626 = vsel %vm1603, %v1576, 0
        %v1629 = vsel %vm1603, %v1577, 0
        %v1632 = vsel %vm1603, %v1578, 0
        %v1635 = vsel %vm1603, %v1579, 0
        %v1638 = vsel %vm1603, %v1580, 0
        %v1641 = vsel %vm1603, %v1581, 0
        %v1644 = vsel %vm1603, %v1582, 0
        %v1647 = vsel %vm1603, %v1583, 0
        %v1650 = vsel %vm1603, %v1584, 0
        %v1653 = vsel %vm1603, %v1585, 0
        %v1656 = vsel %vm1603, %v1586, 0
        %v1659 = vsel %vm1603, %v1587, 0
        %1661 = vmatprep.subr.mxu0 0.0
        %1662 = vmatpush1.msra.mxu0 %v1588
        %1663 = vmatprep.subr.mxu0 0.0
        %1664 = vmatpush1.msra.mxu0 %v1589
        %1665 = vmatprep.subr.mxu0 0.0
        %1666 = vmatpush1.msra.mxu0 %v1590
        %1667 = vmatprep.subr.mxu0 0.0
        %1668 = vmatpush1.msra.mxu0 %v1591
        %1669 = vmatprep.subr.mxu0 0.0
        %1670 = vmatpush1.msra.mxu0 %v1592
        %1671 = vmatprep.subr.mxu0 0.0
        %1672 = vmatpush1.msra.mxu0 %v1593
        %1673 = vmatprep.subr.mxu0 0.0
        %1674 = vmatpush1.msra.mxu0 %v1594
        %1675 = vmatprep.subr.mxu0 0.0
        %1676 = vmatpush1.msra.mxu0 %v1595
        %1677 = vmatprep.subr.mxu0 0.0
        %1678 = vmatpush1.msra.mxu0 0.0
        %1679 = vmatprep.subr.mxu0 0.0
        %1680 = vmatpush1.msra.mxu0 0.0
        %1681 = vmatprep.subr.mxu0 0.0
        %1682 = vmatpush1.msra.mxu0 0.0
        %1683 = vmatprep.subr.mxu0 0.0
        %1684 = vmatpush1.msra.mxu0 0.0
        %1685 = vmatprep.subr.mxu0 0.0
        %1686 = vmatpush1.msra.mxu0 0.0
        %1687 = vmatprep.subr.mxu0 0.0
        %1688 = vmatpush1.msra.mxu0 0.0
        %1689 = vmatprep.subr.mxu0 0.0
        %1690 = vmatpush1.msra.mxu0 0.0
        %1691 = vmatprep.subr.mxu0 0.0
        %1692 = vmatpush1.msra.mxu0 0.0
        %1693 = vmatprep.subr.mxu0 0.0
        %1694 = vmatpush1.msra.mxu0 0.0
        %1695 = vmatprep.subr.mxu0 0.0
        %1696 = vmatpush1.msra.mxu0 0.0
        %1697 = vmatprep.subr.mxu0 0.0
        %1698 = vmatpush1.msra.mxu0 0.0
        %1699 = vmatprep.subr.mxu0 0.0
        %1700 = vmatpush1.msra.mxu0 0.0
        %1701 = vmatprep.subr.mxu0 0.0
        %1702 = vmatpush1.msra.mxu0 0.0
        %1703 = vmatprep.subr.mxu0 0.0
        %1704 = vmatpush1.msra.mxu0 0.0
        %1705 = vmatprep.subr.mxu0 0.0
        %1706 = vmatpush1.msra.mxu0 0.0
        %1707 = vmatprep.subr.mxu0 0.0
        %1708 = vmatpush1.msra.mxu0 0.0
        %1709 = vmatprep.subr.mxu0 0.0
        %1710 = vmatpush1.msra.mxu0 0.0
        %1711 = vmatprep.subr.mxu0 0.0
        %1712 = vmatpush1.msra.mxu0 0.0
        %1713 = vmatprep.subr.mxu0 0.0
        %1714 = vmatpush1.msra.mxu0 0.0
        %1715 = vmatprep.subr.mxu0 0.0
        %1716 = vmatpush1.msra.mxu0 0.0
        %1717 = vmatprep.subr.mxu0 0.0
        %1718 = vmatpush1.msra.mxu0 0.0
        %1719 = vmatprep.subr.mxu0 0.0
        %1720 = vmatpush1.msra.mxu0 0.0
        %1721 = vmatprep.subr.mxu0 0.0
        %1722 = vmatpush1.msra.mxu0 0.0
        %1723 = vmatprep.subr.mxu0 0.0
        %1724 = vmatpush1.msra.mxu0 0.0
        %1725 = vmatprep.mubr.f32.mxu0 0.0
        %1726 = vmatmul.mubr.f32.gmra.mrb[0].mxu0 %v1605
        %v1727 = vpop.f32.mrb[0].mxu0
        %v1728 = vadd.f32 %v1601, %v1727
        %v1729 = vpop.f32.mrb[0].mxu0
        %1730 = vmatprep.mubr.f32.mxu0 0.0
        %1731 = vmatmul.mubr.f32.gmra.mrb[0].mxu0 %v1608
        %v1732 = vpop.f32.mrb[0].mxu0
        %v1733 = vadd.f32 %v1601, %v1732
        %v1734 = vpop.f32.mrb[0].mxu0
        %1735 = vmatprep.mubr.f32.mxu0 0.0
        %1736 = vmatmul.mubr.f32.gmra.mrb[0].mxu0 %v1611
        %v1737 = vpop.f32.mrb[0].mxu0
        %v1738 = vadd.f32 %v1601, %v1737
        %v1739 = vpop.f32.mrb[0].mxu0
        %1740 = vmatprep.mubr.f32.mxu0 0.0
        %1741 = vmatmul.mubr.f32.gmra.mrb[0].mxu0 %v1614
        %v1742 = vpop.f32.mrb[0].mxu0
        %v1743 = vadd.f32 %v1601, %v1742
        %v1744 = vpop.f32.mrb[0].mxu0
        %1745 = vmatprep.mubr.f32.mxu0 0.0
        %1746 = vmatmul.mubr.f32.gmra.mrb[0].mxu0 %v1617
        %v1747 = vpop.f32.mrb[0].mxu0
        %v1748 = vadd.f32 %v1601, %v1747
        %v1749 = vpop.f32.mrb[0].mxu0
        %1750 = vmatprep.mubr.f32.mxu0 0.0
        %1751 = vmatmul.mubr.f32.gmra.mrb[0].mxu0 %v1620
        %v1752 = vpop.f32.mrb[0].mxu0
        %v1753 = vadd.f32 %v1601, %v1752
        %v1754 = vpop.f32.mrb[0].mxu0
        %1755 = vmatprep.mubr.f32.mxu0 0.0
        %1756 = vmatmul.mubr.f32.gmra.mrb[0].mxu0 %v1623
        %v1757 = vpop.f32.mrb[0].mxu0
        %v1758 = vadd.f32 %v1601, %v1757
        %v1759 = vpop.f32.mrb[0].mxu0
        %1760 = vmatprep.mubr.f32.mxu0 0.0
        %1761 = vmatmul.mubr.f32.gmra.mrb[0].mxu0 %v1626
        %v1762 = vpop.f32.mrb[0].mxu0
        %v1763 = vadd.f32 %v1601, %v1762
        %v1764 = vpop.f32.mrb[0].mxu0
        %1765 = vmatprep.mubr.f32.mxu0 0.0
        %1766 = vmatmul.mubr.f32.gmra.mrb[0].mxu0 %v1629
        %v1767 = vpop.f32.mrb[0].mxu0
        %v1768 = vadd.f32 %v1601, %v1767
        %v1769 = vpop.f32.mrb[0].mxu0
        %1770 = vmatprep.mubr.f32.mxu0 0.0
        %1771 = vmatmul.mubr.f32.gmra.mrb[0].mxu0 %v1632
        %v1772 = vpop.f32.mrb[0].mxu0
        %v1773 = vadd.f32 %v1601, %v1772
        %v1774 = vpop.f32.mrb[0].mxu0
        %1775 = vmatprep.mubr.f32.mxu0 0.0
        %1776 = vmatmul.mubr.f32.gmra.mrb[0].mxu0 %v1635
        %v1777 = vpop.f32.mrb[0].mxu0
        %v1778 = vadd.f32 %v1601, %v1777
        %v1779 = vpop.f32.mrb[0].mxu0
        %1780 = vmatprep.mubr.f32.mxu0 0.0
        %1781 = vmatmul.mubr.f32.gmra.mrb[0].mxu0 %v1638
        %v1782 = vpop.f32.mrb[0].mxu0
        %v1783 = vadd.f32 %v1601, %v1782
        %v1784 = vpop.f32.mrb[0].mxu0
        %1785 = vmatprep.mubr.f32.mxu0 0.0
        %1786 = vmatmul.mubr.f32.gmra.mrb[0].mxu0 %v1641
        %v1787 = vpop.f32.mrb[0].mxu0
        %v1788 = vadd.f32 %v1601, %v1787
        %v1789 = vpop.f32.mrb[0].mxu0
        %1790 = vmatprep.mubr.f32.mxu0 0.0
        %1791 = vmatmul.mubr.f32.gmra.mrb[0].mxu0 %v1644
        %v1792 = vpop.f32.mrb[0].mxu0
        %v1793 = vadd.f32 %v1601, %v1792
        %v1794 = vpop.f32.mrb[0].mxu0
        %1795 = vmatprep.mubr.f32.mxu0 0.0
        %1796 = vmatmul.mubr.f32.gmra.mrb[0].mxu0 %v1647
        %v1797 = vpop.f32.mrb[0].mxu0
        %v1798 = vadd.f32 %v1601, %v1797
        %v1799 = vpop.f32.mrb[0].mxu0
        %1800 = vmatprep.mubr.f32.mxu0 0.0
        %1801 = vmatmul.mubr.f32.gmra.mrb[0].mxu0 %v1650
        %v1802 = vpop.f32.mrb[0].mxu0
        %v1803 = vadd.f32 %v1601, %v1802
        %v1804 = vpop.f32.mrb[0].mxu0
        %1805 = vmatprep.mubr.f32.mxu0 0.0
        %1806 = vmatmul.mubr.f32.gmra.mrb[0].mxu0 %v1653
        %v1807 = vpop.f32.mrb[0].mxu0
        %v1808 = vadd.f32 %v1601, %v1807
        %v1809 = vpop.f32.mrb[0].mxu0
        %1810 = vmatprep.mubr.f32.mxu0 0.0
        %1811 = vmatmul.mubr.f32.gmra.mrb[0].mxu0 %v1656
        %v1812 = vpop.f32.mrb[0].mxu0
        %v1813 = vadd.f32 %v1601, %v1812
        %v1814 = vpop.f32.mrb[0].mxu0
        %1815 = vmatprep.mubr.f32.mxu0 0.0
        %1816 = vmatmul.mubr.f32.gmra.mrb[0].mxu0 %v1659
        %v1817 = vpop.f32.mrb[0].mxu0
        %v1818 = vadd.f32 %v1601, %v1817
        %v1819 = vpop.f32.mrb[0].mxu0
        %1820 = vdwg.mxu0
        %v1821 = vmax.f32 %v1728, 0.0
        %v1822 = vmax.f32 %v1733, 0.0
        %v1823 = vmax.f32 %v1738, 0.0
        %v1824 = vmax.f32 %v1743, 0.0
        %v1825 = vmax.f32 %v1748, 0.0
        %v1826 = vmax.f32 %v1753, 0.0
        %v1827 = vmax.f32 %v1758, 0.0
        %v1828 = vmax.f32 %v1763, 0.0
        %v1829 = vmax.f32 %v1768, 0.0
        %v1830 = vmax.f32 %v1773, 0.0
        %v1831 = vmax.f32 %v1778, 0.0
        %v1832 = vmax.f32 %v1783, 0.0
        %v1833 = vmax.f32 %v1788, 0.0
        %v1834 = vmax.f32 %v1793, 0.0
        %v1835 = vmax.f32 %v1798, 0.0
        %v1836 = vmax.f32 %v1803, 0.0
        %v1837 = vmax.f32 %v1808, 0.0
        %v1838 = vmax.f32 %v1813, 0.0
        %v1839 = vmax.f32 %v1818, 0.0
        %v1840 = vld [vmem:[#allocation11] sm:$0xff]
        %v1841 = vld [vmem:[#allocation13] sm:$0x1]
        %v1843 = vlaneseq
        %v1844 = vshrl.u32 %v1843, 7
        %v1845 = vsub.s32 0, %v1844
        %v1846 = vrot.slane %v1841, %v1845
        %vm1848 = vcmask 64512
        %v1850 = vsel %vm1848, %v1821, 0
        %v1853 = vsel %vm1848, %v1822, 0
        %v1856 = vsel %vm1848, %v1823, 0
        %v1859 = vsel %vm1848, %v1824, 0
        %v1862 = vsel %vm1848, %v1825, 0
        %v1865 = vsel %vm1848, %v1826, 0
        %v1868 = vsel %vm1848, %v1827, 0
        %v1871 = vsel %vm1848, %v1828, 0
        %v1874 = vsel %vm1848, %v1829, 0
        %v1877 = vsel %vm1848, %v1830, 0
        %v1880 = vsel %vm1848, %v1831, 0
        %v1883 = vsel %vm1848, %v1832, 0
        %v1886 = vsel %vm1848, %v1833, 0
        %v1889 = vsel %vm1848, %v1834, 0
        %v1892 = vsel %vm1848, %v1835, 0
        %v1895 = vsel %vm1848, %v1836, 0
        %v1898 = vsel %vm1848, %v1837, 0
        %v1901 = vsel %vm1848, %v1838, 0
        %v1904 = vsel %vm1848, %v1839, 0
        %1906 = vmatprep.subr.mxu0 0.0
        %1907 = vmatpush1.msra.mxu0 %v1840
        %1908 = vmatprep.subr.mxu0 0.0
        %1909 = vmatpush1.msra.mxu0 0.0
        %1910 = vmatprep.subr.mxu0 0.0
        %1911 = vmatpush1.msra.mxu0 0.0
        %1912 = vmatprep.subr.mxu0 0.0
        %1913 = vmatpush1.msra.mxu0 0.0
        %1914 = vmatprep.subr.mxu0 0.0
        %1915 = vmatpush1.msra.mxu0 0.0
        %1916 = vmatprep.subr.mxu0 0.0
        %1917 = vmatpush1.msra.mxu0 0.0
        %1918 = vmatprep.subr.mxu0 0.0
        %1919 = vmatpush1.msra.mxu0 0.0
        %1920 = vmatprep.subr.mxu0 0.0
        %1921 = vmatpush1.msra.mxu0 0.0
        %1922 = vmatprep.subr.mxu0 0.0
        %1923 = vmatpush1.msra.mxu0 0.0
        %1924 = vmatprep.subr.mxu0 0.0
        %1925 = vmatpush1.msra.mxu0 0.0
        %1926 = vmatprep.subr.mxu0 0.0
        %1927 = vmatpush1.msra.mxu0 0.0
        %1928 = vmatprep.subr.mxu0 0.0
        %1929 = vmatpush1.msra.mxu0 0.0
        %1930 = vmatprep.subr.mxu0 0.0
        %1931 = vmatpush1.msra.mxu0 0.0
        %1932 = vmatprep.subr.mxu0 0.0
        %1933 = vmatpush1.msra.mxu0 0.0
        %1934 = vmatprep.subr.mxu0 0.0
        %1935 = vmatpush1.msra.mxu0 0.0
        %1936 = vmatprep.subr.mxu0 0.0
        %1937 = vmatpush1.msra.mxu0 0.0
        %1938 = vmatprep.subr.mxu0 0.0
        %1939 = vmatpush1.msra.mxu0 0.0
        %1940 = vmatprep.subr.mxu0 0.0
        %1941 = vmatpush1.msra.mxu0 0.0
        %1942 = vmatprep.subr.mxu0 0.0
        %1943 = vmatpush1.msra.mxu0 0.0
        %1944 = vmatprep.subr.mxu0 0.0
        %1945 = vmatpush1.msra.mxu0 0.0
        %1946 = vmatprep.subr.mxu0 0.0
        %1947 = vmatpush1.msra.mxu0 0.0
        %1948 = vmatprep.subr.mxu0 0.0
        %1949 = vmatpush1.msra.mxu0 0.0
        %1950 = vmatprep.subr.mxu0 0.0
        %1951 = vmatpush1.msra.mxu0 0.0
        %1952 = vmatprep.subr.mxu0 0.0
        %1953 = vmatpush1.msra.mxu0 0.0
        %1954 = vmatprep.subr.mxu0 0.0
        %1955 = vmatpush1.msra.mxu0 0.0
        %1956 = vmatprep.subr.mxu0 0.0
        %1957 = vmatpush1.msra.mxu0 0.0
        %1958 = vmatprep.subr.mxu0 0.0
        %1959 = vmatpush1.msra.mxu0 0.0
        %1960 = vmatprep.subr.mxu0 0.0
        %1961 = vmatpush1.msra.mxu0 0.0
        %1962 = vmatprep.subr.mxu0 0.0
        %1963 = vmatpush1.msra.mxu0 0.0
        %1964 = vmatprep.subr.mxu0 0.0
        %1965 = vmatpush1.msra.mxu0 0.0
        %1966 = vmatprep.subr.mxu0 0.0
        %1967 = vmatpush1.msra.mxu0 0.0
        %1968 = vmatprep.subr.mxu0 0.0
        %1969 = vmatpush1.msra.mxu0 0.0
        %1970 = vmatprep.mubr.f32.mxu0 0.0
        %1971 = vmatmul.mubr.f32.gmra.mrb[0].mxu0 %v1850
        %v1972 = vpop.f32.mrb[0].mxu0
        %v1973 = vadd.f32 %v1846, %v1972
        %v1974 = vpop.f32.mrb[0].mxu0
        %1975 = vmatprep.mubr.f32.mxu0 0.0
        %1976 = vmatmul.mubr.f32.gmra.mrb[0].mxu0 %v1853
        %v1977 = vpop.f32.mrb[0].mxu0
        %v1978 = vadd.f32 %v1846, %v1977
        %v1979 = vpop.f32.mrb[0].mxu0
        %1980 = vmatprep.mubr.f32.mxu0 0.0
        %1981 = vmatmul.mubr.f32.gmra.mrb[0].mxu0 %v1856
        %v1982 = vpop.f32.mrb[0].mxu0
        %v1983 = vadd.f32 %v1846, %v1982
        %v1984 = vpop.f32.mrb[0].mxu0
        %1985 = vmatprep.mubr.f32.mxu0 0.0
        %1986 = vmatmul.mubr.f32.gmra.mrb[0].mxu0 %v1859
        %v1987 = vpop.f32.mrb[0].mxu0
        %v1988 = vadd.f32 %v1846, %v1987
        %v1989 = vpop.f32.mrb[0].mxu0
        %1990 = vmatprep.mubr.f32.mxu0 0.0
        %1991 = vmatmul.mubr.f32.gmra.mrb[0].mxu0 %v1862
        %v1992 = vpop.f32.mrb[0].mxu0
        %v1993 = vadd.f32 %v1846, %v1992
        %v1994 = vpop.f32.mrb[0].mxu0
        %1995 = vmatprep.mubr.f32.mxu0 0.0
        %1996 = vmatmul.mubr.f32.gmra.mrb[0].mxu0 %v1865
        %v1997 = vpop.f32.mrb[0].mxu0
        %v1998 = vadd.f32 %v1846, %v1997
        %v1999 = vpop.f32.mrb[0].mxu0
        %2000 = vmatprep.mubr.f32.mxu0 0.0
        %2001 = vmatmul.mubr.f32.gmra.mrb[0].mxu0 %v1868
        %v2002 = vpop.f32.mrb[0].mxu0
        %v2003 = vadd.f32 %v1846, %v2002
        %v2004 = vpop.f32.mrb[0].mxu0
        %2005 = vmatprep.mubr.f32.mxu0 0.0
        %2006 = vmatmul.mubr.f32.gmra.mrb[0].mxu0 %v1871
        %v2007 = vpop.f32.mrb[0].mxu0
        %v2008 = vadd.f32 %v1846, %v2007
        %v2009 = vpop.f32.mrb[0].mxu0
        %2010 = vmatprep.mubr.f32.mxu0 0.0
        %2011 = vmatmul.mubr.f32.gmra.mrb[0].mxu0 %v1874
        %v2012 = vpop.f32.mrb[0].mxu0
        %v2013 = vadd.f32 %v1846, %v2012
        %v2014 = vpop.f32.mrb[0].mxu0
        %2015 = vmatprep.mubr.f32.mxu0 0.0
        %2016 = vmatmul.mubr.f32.gmra.mrb[0].mxu0 %v1877
        %v2017 = vpop.f32.mrb[0].mxu0
        %v2018 = vadd.f32 %v1846, %v2017
        %v2019 = vpop.f32.mrb[0].mxu0
        %2020 = vmatprep.mubr.f32.mxu0 0.0
        %2021 = vmatmul.mubr.f32.gmra.mrb[0].mxu0 %v1880
        %v2022 = vpop.f32.mrb[0].mxu0
        %v2023 = vadd.f32 %v1846, %v2022
        %v2024 = vpop.f32.mrb[0].mxu0
        %2025 = vmatprep.mubr.f32.mxu0 0.0
        %2026 = vmatmul.mubr.f32.gmra.mrb[0].mxu0 %v1883
        %v2027 = vpop.f32.mrb[0].mxu0
        %v2028 = vadd.f32 %v1846, %v2027
        %v2029 = vpop.f32.mrb[0].mxu0
        %2030 = vmatprep.mubr.f32.mxu0 0.0
        %2031 = vmatmul.mubr.f32.gmra.mrb[0].mxu0 %v1886
        %v2032 = vpop.f32.mrb[0].mxu0
        %v2033 = vadd.f32 %v1846, %v2032
        %v2034 = vpop.f32.mrb[0].mxu0
        %2035 = vmatprep.mubr.f32.mxu0 0.0
        %2036 = vmatmul.mubr.f32.gmra.mrb[0].mxu0 %v1889
        %v2037 = vpop.f32.mrb[0].mxu0
        %v2038 = vadd.f32 %v1846, %v2037
        %v2039 = vpop.f32.mrb[0].mxu0
        %2040 = vmatprep.mubr.f32.mxu0 0.0
        %2041 = vmatmul.mubr.f32.gmra.mrb[0].mxu0 %v1892
        %v2042 = vpop.f32.mrb[0].mxu0
        %v2043 = vadd.f32 %v1846, %v2042
        %v2044 = vpop.f32.mrb[0].mxu0
        %2045 = vmatprep.mubr.f32.mxu0 0.0
        %2046 = vmatmul.mubr.f32.gmra.mrb[0].mxu0 %v1895
        %v2047 = vpop.f32.mrb[0].mxu0
        %v2048 = vadd.f32 %v1846, %v2047
        %v2049 = vpop.f32.mrb[0].mxu0
        %2050 = vmatprep.mubr.f32.mxu0 0.0
        %2051 = vmatmul.mubr.f32.gmra.mrb[0].mxu0 %v1898
        %v2052 = vpop.f32.mrb[0].mxu0
        %v2053 = vadd.f32 %v1846, %v2052
        %v2054 = vpop.f32.mrb[0].mxu0
        %2055 = vmatprep.mubr.f32.mxu0 0.0
        %2056 = vmatmul.mubr.f32.gmra.mrb[0].mxu0 %v1901
        %v2057 = vpop.f32.mrb[0].mxu0
        %v2058 = vadd.f32 %v1846, %v2057
        %v2059 = vpop.f32.mrb[0].mxu0
        %2060 = vmatprep.mubr.f32.mxu0 0.0
        %2061 = vmatmul.mubr.f32.gmra.mrb[0].mxu0 %v1904
        %v2062 = vpop.f32.mrb[0].mxu0
        %v2063 = vadd.f32 %v1846, %v2062
        %v2064 = vpop.f32.mrb[0].mxu0
        %2065 = vdwg.mxu0
        %2066 = vst [vmem:[%s428] sm:$0xff] %v1973
        %2067 = vst [vmem:[%s428 + $0x8] sm:$0xff] %v1978
        %2068 = vst [vmem:[%s428 + $0x10] sm:$0xff] %v1983
        %2069 = vst [vmem:[%s428 + $0x18] sm:$0xff] %v1988
        %2070 = vst [vmem:[%s428 + $0x20] sm:$0xff] %v1993
        %2071 = vst [vmem:[%s428 + $0x28] sm:$0xff] %v1998
        %2072 = vst [vmem:[%s428 + $0x30] sm:$0xff] %v2003
        %2073 = vst [vmem:[%s428 + $0x38] sm:$0xff] %v2008
        %2074 = vst [vmem:[%s428 + $0x40] sm:$0xff] %v2013
        %2075 = vst [vmem:[%s428 + $0x48] sm:$0xff] %v2018
        %2076 = vst [vmem:[%s428 + $0x50] sm:$0xff] %v2023
        %2077 = vst [vmem:[%s428 + $0x58] sm:$0xff] %v2028
        %2078 = vst [vmem:[%s428 + $0x60] sm:$0xff] %v2033
        %2079 = vst [vmem:[%s428 + $0x68] sm:$0xff] %v2038
        %2080 = vst [vmem:[%s428 + $0x70] sm:$0xff] %v2043
        %2081 = vst [vmem:[%s428 + $0x78] sm:$0xff] %v2048
        %2082 = vst [vmem:[%s428 + $0x80] sm:$0xff] %v2053
        %2083 = vst [vmem:[%s428 + $0x88] sm:$0xff] %v2058
        %2084 = vst [vmem:[%s428 + $0x90] sm:$0xff] %v2063
        %s2085 = sand.u32 %s231, 1
        %s2086 = scalar_lea.sflag [#allocation4], %s2085
        %s2087 = sand.u32 %s231, 1
        %s2088 = smul.addr %s2087, 152
        %s2089 = scalar_lea.vmem [#allocation14], %s2088
        // Predicated region
        $region85: #{tpu_custom_call.1} parent=55 // pred_check
          %p2090 = pneg %p241
        $region86: #{tpu_custom_call.1} parent=55 // pred_check_branch
          %2092 = sbr.rel (%p2090) target = $region88
        $region87: #{tpu_custom_call.1} parent=55 // pred_region
          %s2093 = smul.u32 19, %s29
          %s2095 = ssub.s32 2432, 2432
          %2096 = vsyncadd %s2086, %s2095
          %s2097 = smul.addr %s2093, 128
          %s2098 = scalar_lea.hbm %s9, %s2097
          %s2099 = sshll.u32 %s2089, 4
          %s2100 = int_to_ptr.vmem [resolvable:$true] %s2099
          %2105 = dma.vmem_to_hbm [thread:$0]  %s2100, 2432, %s2098, %s2086, 128, 128, 8
        $region88: #{tpu_custom_call.1} parent=55 // pred_fallthru
          _
      $region56: #{tpu_custom_call.1} parent=5 // pred_fallthru
        _
      %p2106 = scmp.le.s32.totalorder 2, %s24
      // Predicated region
      $region89: #{tpu_custom_call.1} parent=5 // pred_check
        %p2107 = pneg %p2106
      $region90: #{tpu_custom_call.1} parent=5 // pred_check_branch
        %2109 = sbr.rel (%p2107) target = $region92
      $region91: #{tpu_custom_call.1} parent=5 // pred_region
        %s2110 = ssub.s32 %s24, 2
        // Predicated region
        $region93: #{tpu_custom_call.1} parent=91 // pred_check
          %p2111 = pneg %p247
        $region94: #{tpu_custom_call.1} parent=91 // pred_check_branch
          %2113 = sbr.rel (%p2111) target = $region96
        $region95: #{tpu_custom_call.1} parent=91 // pred_region
          %s2114 = sand.u32 %s232, 1
          %s2115 = scalar_lea.sflag [#allocation4], %s2114
          %s2116 = sand.u32 %s232, 1
          %s2117 = smul.addr %s2116, 152
          %s2118 = scalar_lea.vmem [#allocation14], %s2117
          %2119 = dma.done %s2115, 2432
        $region96: #{tpu_custom_call.1} parent=91 // pred_fallthru
          _
      $region92: #{tpu_custom_call.1} parent=5 // pred_fallthru
        _
    $region6: #{tpu_custom_call.1} parent=1 // loop_footer
      %s28 = sadd.s32 1, %s24
    $region7: #{tpu_custom_call.1} parent=1 // loop_footer_branch
      %23 = sbr.rel target = $region3
    $region8: #{tpu_custom_call.1} parent=1 // loop_exit
      _
    %2120 = vsyncpa [#allocation3], 1
    %s2121 = scalar_lea.sflag [#allocation3], 1
    %2122 = vsyncpa %s2121, 1
    %2123 = vsyncpa [#allocation6], 1
    %2124 = vsyncpa [#allocation9], 1
    %2125 = vsyncpa [#allocation12], 1
    %2126 = vsyncpa [#allocation4], 1
    %s2127 = scalar_lea.sflag [#allocation4], 1
    %2128 = vsyncpa %s2127, 1

</llo_original>
